<compile_context>
chip_gen: v6e
topology: v6e:2x2x1
jax: 0.10.0
libtpu: 0.0.40
codegen_flags: <defaults>
</compile_context>

<pallas_src>
import functools

import jax
import jax.numpy as jnp
from jax.experimental import pallas as pl
from jax.experimental.pallas import tpu as pltpu


def _round_up(x, m):
    return ((x + m - 1) // m) * m


# ---------------------------------------------------------------------------
# Kernel 1: Conv3x3 (im2col matmul) + bias + ReLU + global-avg-pool -> bf16 feats
# ---------------------------------------------------------------------------

def _conv_gap_kernel(p_ref, w_ref, b_ref, o_ref, *, n_blk, hw):
    # p_ref: (n_blk*hw, Kp) bf16   w_ref: (Kp, Cout) bf16 (zero rows past 9*Cin)
    # b_ref: (1, Cout) f32         o_ref: (n_blk, 1, Cout) bf16
    conv = jnp.dot(p_ref[...], w_ref[...], preferred_element_type=jnp.float32)
    conv = jnp.maximum(conv + b_ref[...], 0.0)              # bias + ReLU (f32)
    cout = conv.shape[-1]
    feat = jnp.mean(conv.reshape(n_blk, hw, cout), axis=1, keepdims=True)
    o_ref[...] = feat.astype(o_ref.dtype)                   # bf16 writeback


def _num_conv_grid_blocks(n_images, hw):
    # Two "parallel" grid steps only help on dual-TensorCore chips (v7x); on
    # single-TC v5e/v6e an extra grid step is pure per-step pipeline overhead.
    try:
        kind = jax.devices()[0].device_kind.lower()
    except Exception:  # pragma: no cover - device query failure
        kind = ""
    if "v7" in kind and n_images % 2 == 0 and ((n_images // 2) * hw) % 8 == 0:
        return 2
    return 1


def conv_gap(patches, w_pad, bias, *, n_images, hw):
    """patches: (N*HW, Kp) bf16 -> (N, Cout) bf16 features."""
    R, Kp = patches.shape
    assert R == n_images * hw
    Cout = w_pad.shape[1]
    num_blocks = _num_conv_grid_blocks(n_images, hw)
    n_blk = n_images // num_blocks

    out = pl.pallas_call(
        functools.partial(_conv_gap_kernel, n_blk=n_blk, hw=hw),
        out_shape=jax.ShapeDtypeStruct((n_images, 1, Cout), jnp.bfloat16),
        grid=(num_blocks,),
        in_specs=[
            pl.BlockSpec((n_blk * hw, Kp), lambda i: (i, 0)),
            pl.BlockSpec((Kp, Cout), lambda i: (0, 0)),    # weights resident
            pl.BlockSpec((1, Cout), lambda i: (0, 0)),
        ],
        out_specs=pl.BlockSpec((n_blk, 1, Cout), lambda i: (i, 0, 0)),
        compiler_params=pltpu.CompilerParams(dimension_semantics=("parallel",)),
    )(patches, w_pad, bias)
    return out.reshape(n_images, Cout)


# ---------------------------------------------------------------------------
# Kernel 2: fused encoder LSTM + decoder (embedding -> LSTM -> linear -> argmax)
# ---------------------------------------------------------------------------

def _seq_lstm_kernel(*refs, t_in, t_out, hidden, start_token, teacher_forcing):
    if teacher_forcing:
        (enc_ref, wih_ref, whh_ref, b_ref, emb_ref, wout_ref, bout_ref,
         lab_ref, out_ref, x_all_ref, h_all_ref) = refs
    else:
        (enc_ref, wih_ref, whh_ref, b_ref, emb_ref, wout_ref, bout_ref,
         out_ref) = refs

    B = enc_ref.shape[1]
    Hh = hidden
    V = emb_ref.shape[0]            # vocab rows, padded to a multiple of 32
    Cpad = wout_ref.shape[1]
    f32, bf16 = jnp.float32, jnp.bfloat16

    # Loop-invariant small broadcast, hoisted out of the recurrent loops.
    bias_b = jnp.broadcast_to(b_ref[...], (B, 4 * Hh))          # (B, 4H) f32

    def cell(x_bf, h_bf, c):
        # Split matmuls (no per-step [x, h] concat); weights read at use site.
        gates = jnp.dot(x_bf, wih_ref[...], preferred_element_type=f32)
        gates = gates + jnp.dot(h_bf, whh_ref[...], preferred_element_type=f32)
        gates = gates + bias_b
        ig = jax.nn.sigmoid(gates[:, 0 * Hh:1 * Hh])
        fg = jax.nn.sigmoid(gates[:, 1 * Hh:2 * Hh])
        gg = jnp.tanh(gates[:, 2 * Hh:3 * Hh])
        og = jax.nn.sigmoid(gates[:, 3 * Hh:4 * Hh])
        c_new = fg * c + ig * gg
        h_new = (og * jnp.tanh(c_new)).astype(bf16)
        return h_new, c_new

    h0 = jnp.zeros((B, Hh), bf16)
    c0 = jnp.zeros((B, Hh), f32)

    # --- encoder: consume the CNN feature sequence, keep only (h, c) ---
    def enc_body(t, hc):
        h, c = hc
        return cell(enc_ref[t], h, c)

    h, c = jax.lax.fori_loop(0, t_in, enc_body, (h0, c0), unroll=t_in <= 8)

    if teacher_forcing:
        # Decoder inputs are known upfront: ONE batched one-hot matmul for all
        # t_out*B embeddings, kept in a VMEM scratch and sliced per step.
        toks = lab_ref[...]                                     # (t_out*B, 1) i32
        onehot = (jax.lax.broadcasted_iota(jnp.int32, (t_out * B, V), 1)
                  == toks).astype(bf16)
        x_all_ref[...] = jnp.dot(onehot, emb_ref[...],
                                 preferred_element_type=f32)

        def dec_body(i, hc):
            h, c = hc
            x = x_all_ref[pl.ds(i * B, B), :].astype(bf16)
            h, c = cell(x, h, c)
            h_all_ref[pl.ds(i * B, B), :] = h.astype(f32)
            return (h, c)

        jax.lax.fori_loop(0, t_out, dec_body, (h, c), unroll=t_out <= 8)

        # Output projection hoisted out of the loop: one sublane/lane-dense
        # matmul and one slab store instead of t_out tiny ones.
        logits = jnp.dot(h_all_ref[...].astype(bf16), wout_ref[...],
                         preferred_element_type=f32)
        out_ref[...] = logits + jnp.broadcast_to(bout_ref[...],
                                                 (t_out * B, Cpad))
    else:
        bout_b = jnp.broadcast_to(bout_ref[...], (B, Cpad))     # (B, Cpad) f32
        lane_idx = jax.lax.broadcasted_iota(jnp.int32, (B, Cpad), 1)
        vocab_idx = jax.lax.broadcasted_iota(jnp.int32, (B, V), 1)
        tok0 = jnp.full((B, 1), start_token, dtype=jnp.int32)

        def dec_body(i, carry):
            h, c, tok = carry
            onehot = (vocab_idx == tok).astype(bf16)
            x = jnp.dot(onehot, emb_ref[...],
                        preferred_element_type=f32).astype(bf16)
            h, c = cell(x, h, c)
            logits = jnp.dot(h, wout_ref[...],
                             preferred_element_type=f32) + bout_b
            out_ref[i] = logits                                 # lane-dense store
            # greedy argmax feedback; padded logit columns carry -1e30 bias so
            # they are never selected.
            m = jnp.max(logits, axis=-1, keepdims=True)
            cand = jnp.where(logits == m, lane_idx, jnp.int32(2 ** 30))
            tok = jnp.min(cand, axis=-1, keepdims=True).astype(jnp.int32)
            return (h, c, tok)

        jax.lax.fori_loop(0, t_out, dec_body, (h, c, tok0), unroll=t_out <= 8)


def fused_lstm_decode(enc, params, *, output_length, start_token,
                      dec_tokens=None):
    """enc: (T_in, B, D) bf16 -> padded logits (T_out, B, Cpad) f32."""
    t_in, B, D = enc.shape
    hidden = params["b_lstm"].shape[1] // 4
    c_pad = params["w_out_pad"].shape[1]
    teacher = dec_tokens is not None

    kern = functools.partial(
        _seq_lstm_kernel, t_in=t_in, t_out=output_length, hidden=hidden,
        start_token=start_token, teacher_forcing=teacher)

    operands = [enc, params["w_ih"], params["w_hh"], params["b_lstm"],
                params["embedding"], params["w_out_pad"], params["b_out_pad"]]
    scratch = []
    if teacher:
        operands.append(dec_tokens)
        out_shape = jax.ShapeDtypeStruct((output_length * B, c_pad), jnp.float32)
        scratch = [pltpu.VMEM((output_length * B, D), jnp.float32),       # x_all
                   pltpu.VMEM((output_length * B, hidden), jnp.float32)]  # h_all
    else:
        out_shape = jax.ShapeDtypeStruct((output_length, B, c_pad), jnp.float32)

    out = pl.pallas_call(
        kern,
        out_shape=out_shape,
        in_specs=[pl.BlockSpec(memory_space=pltpu.MemorySpace.VMEM)
                  for _ in operands],
        out_specs=pl.BlockSpec(memory_space=pltpu.MemorySpace.VMEM),
        scratch_shapes=scratch,
    )(*operands)

    if teacher:
        out = out.reshape(output_length, B, c_pad)
    return out


# ---------------------------------------------------------------------------
# Plain-JAX glue
# ---------------------------------------------------------------------------

def im2col_3x3(x_nhwc, k_pad):
    """(N,H,W,C) -> (N*H*W, k_pad) bf16 patches for a 3x3, pad=1, stride=1 conv."""
    N, H, W, C = x_nhwc.shape
    xp = jnp.pad(x_nhwc, ((0, 0), (1, 1), (1, 1), (0, 0)))
    cols = [xp[:, kh:kh + H, kw:kw + W, :] for kh in range(3) for kw in range(3)]
    cols = jnp.concatenate(cols, axis=-1).reshape(N * H * W, 9 * C)  # (kh,kw,cin)
    if k_pad > 9 * C:
        cols = jnp.pad(cols, ((0, 0), (0, k_pad - 9 * C)))
    return cols.astype(jnp.bfloat16)


def init_params(key, *, cnn_input_dim, cnn_hidden_size, rnn_input_dim,
                rnn_hidden_size, num_classes):
    assert cnn_hidden_size == rnn_input_dim, "CNN feature dim feeds the LSTM"
    ks = jax.random.split(key, 5)
    s = 0.02
    k_raw = 9 * cnn_input_dim
    k_pad = _round_up(k_raw, 16)                 # bf16 sublane quantum only
    c_pad = _round_up(max(num_classes, 128), 128)
    v_raw = num_classes + 2
    v_pad = _round_up(v_raw, 32)                 # sublane-aligned one-hot K

    conv_w = s * jax.random.normal(ks[0], (k_raw, cnn_hidden_size), jnp.float32)
    conv_w_pad = jnp.zeros((k_pad, cnn_hidden_size),
                           jnp.float32).at[:k_raw].set(conv_w)

    emb = s * jax.random.normal(ks[1], (v_raw, rnn_input_dim), jnp.float32)
    emb_pad = jnp.zeros((v_pad, rnn_input_dim), jnp.float32).at[:v_raw].set(emb)

    wih = s * jax.random.normal(ks[2], (rnn_input_dim, 4 * rnn_hidden_size),
                                jnp.float32)
    whh = s * jax.random.normal(ks[3], (rnn_hidden_size, 4 * rnn_hidden_size),
                                jnp.float32)

    w_out = s * jax.random.normal(ks[4], (rnn_hidden_size, num_classes),
                                  jnp.float32)
    w_out_pad = jnp.zeros((rnn_hidden_size, c_pad),
                          jnp.float32).at[:, :num_classes].set(w_out)
    # padded logit columns get -1e30 so greedy argmax never picks a padding class
    b_out_pad = jnp.full((1, c_pad), -1e30,
                         jnp.float32).at[:, :num_classes].set(0.0)

    return dict(
        conv_w_pad=conv_w_pad.astype(jnp.bfloat16),              # (k_pad, Cout)
        conv_b=jnp.zeros((1, cnn_hidden_size), jnp.float32),
        embedding=emb_pad.astype(jnp.bfloat16),                  # (v_pad, D)
        w_ih=wih.astype(jnp.bfloat16),                           # (D, 4H)
        w_hh=whh.astype(jnp.bfloat16),                           # (H, 4H)
        b_lstm=jnp.zeros((1, 4 * rnn_hidden_size), jnp.float32),  # = b_ih + b_hh
        w_out_pad=w_out_pad.astype(jnp.bfloat16),                # (H, Cpad)
        b_out_pad=b_out_pad,                                     # (1, Cpad)
    )


def convlstm_forward(images, params, *, input_length, output_length,
                     num_classes, rnn_hidden_size, labels=None):
    """images: (batch*input_length, Cin, H, W) NCHW.
    Returns logits of shape (batch*output_length, num_classes)."""
    assert params["b_lstm"].shape[1] == 4 * rnn_hidden_size
    start_token = 27
    N = images.shape[0]
    batch = N // input_length
    H, W = images.shape[2], images.shape[3]

    # --- CNN encoder (Conv3x3 + ReLU + GAP) ---
    x = jnp.transpose(images, (0, 2, 3, 1)).astype(jnp.float32)     # NCHW -> NHWC
    k_pad = params["conv_w_pad"].shape[0]
    patches = im2col_3x3(x, k_pad)                                  # (N*HW, k_pad)
    feats = conv_gap(patches, params["conv_w_pad"], params["conv_b"],
                     n_images=N, hw=H * W)                          # (N, D) bf16

    enc = feats.reshape(batch, input_length, -1).transpose(1, 0, 2)  # (T_in, B, D)

    # --- teacher-forcing tokens: step-major (t, b) rows, start token prepended ---
    dec_tokens = None
    if labels is not None:
        lab = labels.reshape(batch, -1).astype(jnp.int32)
        lab = jnp.concatenate(
            [jnp.full((batch, 1), start_token, dtype=jnp.int32), lab], axis=1)
        dec_tokens = lab[:, :output_length].T.reshape(output_length * batch, 1)

    # --- fused LSTM encoder + decoder (one kernel, weights resident in VMEM) ---
    logits_pad = fused_lstm_decode(enc, params, output_length=output_length,
                                   start_token=start_token,
                                   dec_tokens=dec_tokens)           # (T_out,B,Cpad)
    out = logits_pad[..., :num_classes]                             # drop lane pad
    return jnp.transpose(out, (1, 0, 2)).reshape(-1, num_classes)


# ---------------------------------------------------------------------------
# Demo
# ---------------------------------------------------------------------------

if __name__ == "__main__":
    input_length = 4
    output_length = 3
    num_classes = 26          # start_token = 27, embedding table = num_classes + 2
    batch = 2
    H = W = 16
    cnn_input_dim = 1
    cnn_hidden_size = rnn_input_dim = 128
    rnn_hidden_size = 128

    key = jax.random.PRNGKey(0)
    k_param, k_img, k_lab = jax.random.split(key, 3)
    params = init_params(k_param,
                         cnn_input_dim=cnn_input_dim,
                         cnn_hidden_size=cnn_hidden_size,
                         rnn_input_dim=rnn_input_dim,
                         rnn_hidden_size=rnn_hidden_size,
                         num_classes=num_classes)

    images = jax.random.normal(
        k_img, (batch * input_length, cnn_input_dim, H, W), jnp.float32)

    # test-phase path (greedy argmax feedback inside the fused kernel)
    out = convlstm_forward(images, params,
                           input_length=input_length,
                           output_length=output_length,
                           num_classes=num_classes,
                           rnn_hidden_size=rnn_hidden_size,
                           labels=None)
    out = jax.block_until_ready(out)
    assert out.shape == (batch * output_length, num_classes), out.shape
    assert jnp.isfinite(out).all()

    # training-phase path (teacher forcing; projection/embedding batched out of loop)
    labels = jax.random.randint(k_lab, (batch * output_length,), 0, num_classes,
                                dtype=jnp.int32)
    out_tf = convlstm_forward(images, params,
                              input_length=input_length,
                              output_length=output_length,
                              num_classes=num_classes,
                              rnn_hidden_size=rnn_hidden_size,
                              labels=labels)
    out_tf = jax.block_until_ready(out_tf)
    assert out_tf.shape == (batch * output_length, num_classes), out_tf.shape
    assert jnp.isfinite(out_tf).all()

    print("KERNEL_OK")
</pallas_src>

<mosaic_0001>
module attributes {stable_mosaic.version = 11 : i64} {
  func.func @_conv_gap_kernel(%arg0: i32, %arg1: memref<2048x16xbf16, #tpu.memory_space<vmem>>, %arg2: memref<16x128xbf16, #tpu.memory_space<vmem>>, %arg3: memref<1x128xf32, #tpu.memory_space<vmem>>, %arg4: memref<8x1x128xbf16, #tpu.memory_space<vmem>>) attributes {dimension_semantics = [#tpu.dimension_semantics<parallel>], iteration_bounds = array<i64: 1>, scalar_prefetch = 0 : i64, scratch_operands = 0 : i64, tpu.core_type = #tpu.core_type<tc>, window_params = [{transform_indices = @transform_0, window_bounds = array<i64: 2048, 16>}, {pipeline_mode = #tpu.pipeline_mode<synchronous>, transform_indices = @transform_1, window_bounds = array<i64: 16, 128>}, {pipeline_mode = #tpu.pipeline_mode<synchronous>, transform_indices = @transform_2, window_bounds = array<i64: 1, 128>}, {transform_indices = @transform_3, window_bounds = array<i64: 8, 1, 128>}]} {
    %c0 = arith.constant 0 : index
    %c0_0 = arith.constant 0 : index
    %0 = vector.load %arg1[%c0, %c0_0] : memref<2048x16xbf16, #tpu.memory_space<vmem>>, vector<2048x16xbf16>
    %c0_1 = arith.constant 0 : index
    %c0_2 = arith.constant 0 : index
    %1 = vector.load %arg2[%c0_1, %c0_2] : memref<16x128xbf16, #tpu.memory_space<vmem>>, vector<16x128xbf16>
    %cst = arith.constant dense<0.000000e+00> : vector<2048x128xf32>
    %2 = tpu.matmul %0, %1, %cst {dimension_numbers = #tpu.dot_dimension_numbers<[1], [0], [0], [1], [0, 0, 1, 1], [], []>} : vector<2048x16xbf16>, vector<16x128xbf16>, vector<2048x128xf32> -> vector<2048x128xf32>
    %c0_3 = arith.constant 0 : index
    %c0_4 = arith.constant 0 : index
    %3 = vector.load %arg3[%c0_3, %c0_4] : memref<1x128xf32, #tpu.memory_space<vmem>>, vector<1x128xf32>
    %4 = vector.broadcast %3 : vector<1x128xf32> to vector<2048x128xf32>
    %5 = arith.addf %2, %4 : vector<2048x128xf32>
    %cst_5 = arith.constant 0.000000e+00 : f32
    %6 = vector.broadcast %cst_5 : f32 to vector<2048x128xf32>
    %7 = arith.maximumf %5, %6 : vector<2048x128xf32>
    %8 = vector.shape_cast %7 : vector<2048x128xf32> to vector<8x256x128xf32>
    %cst_6 = arith.constant dense<0.000000e+00> : vector<8x128xf32>
    %9 = vector.multi_reduction <add>, %8, %cst_6 [1] : vector<8x256x128xf32> to vector<8x128xf32>
    %10 = vector.shape_cast %9 : vector<8x128xf32> to vector<8x1x128xf32>
    %cst_7 = arith.constant 2.560000e+02 : f32
    %11 = vector.broadcast %cst_7 : f32 to vector<8x1x128xf32>
    %12 = arith.divf %10, %11 : vector<8x1x128xf32>
    %13 = arith.truncf %12 : vector<8x1x128xf32> to vector<8x1x128xbf16>
    %c0_8 = arith.constant 0 : index
    %c0_9 = arith.constant 0 : index
    %c0_10 = arith.constant 0 : index
    %14 = vector.load %arg4[%c0_8, %c0_9, %c0_10] : memref<8x1x128xbf16, #tpu.memory_space<vmem>>, vector<8x1x128xbf16>
    tpu.vector_store %arg4[%c0_8, %c0_9, %c0_10], %13 {strides = array<i32>} : memref<8x1x128xbf16, #tpu.memory_space<vmem>>, vector<8x1x128xbf16>,
    return
  }
  func.func @transform_0(%arg0: i32) -> (i32, i32) {
    %c0_i32 = arith.constant 0 : i32
    %c0_i32_0 = arith.constant 0 : i32
    return %arg0, %c0_i32 : i32, i32
  }
  func.func @transform_1(%arg0: i32) -> (i32, i32) {
    %c0_i32 = arith.constant 0 : i32
    %c0_i32_0 = arith.constant 0 : i32
    %c0_i32_1 = arith.constant 0 : i32
    return %c0_i32, %c0_i32_0 : i32, i32
  }
  func.func @transform_2(%arg0: i32) -> (i32, i32) {
    %c0_i32 = arith.constant 0 : i32
    %c0_i32_0 = arith.constant 0 : i32
    %c0_i32_1 = arith.constant 0 : i32
    return %c0_i32, %c0_i32_0 : i32, i32
  }
  func.func @transform_3(%arg0: i32) -> (i32, i32, i32) {
    %c0_i32 = arith.constant 0 : i32
    %c0_i32_0 = arith.constant 0 : i32
    %c0_i32_1 = arith.constant 0 : i32
    return %arg0, %c0_i32, %c0_i32_0 : i32, i32, i32
  }
}

</mosaic_0001>

<llo_original>
// kernel: tpu_custom_call.1
$region0: #{tpu_custom_call.1}
  #allocation0 [shape = 'u32[]', space=smem, size = 0x4, offset = 0x4, fixed_abs, tag = 'smem constant byte address 0x4 - core index']
  #allocation1 [shape = 'u32[144,128]{1,0:T(1,128)}', space=vmem, size = 0x12000, scoped, tag = 'internal scratch']
  %s0 = inlined_call_operand.vmem [shape: bf16[2048,16], index: 0, kind: input, shape index: {}]
  %s1 = inlined_call_operand.vmem [shape: bf16[16,128], index: 1, kind: input, shape index: {}]
  %s2 = inlined_call_operand.vmem [shape: f32[1,128], index: 2, kind: input, shape index: {}]
  %s3 = inlined_call_operand.vmem [shape: bf16[8,1,128], index: 3, kind: output, shape index: {}]
  %s4 = sld [smem:[#allocation0]]
  $region22: #{tpu_custom_call.1} parent=0
    _
  %s6 = ssub.s32 1, %s4
  %s7 = scalar_select 0, %s6, %s4
  // Predicated region
  $region2: #{tpu_custom_call.1} parent=0 // pred_check
    _
  $region3: #{tpu_custom_call.1} parent=0 // pred_check_branch
    %9 = sbr.rel (0) target = $region5
  $region4: #{tpu_custom_call.1} parent=0 // pred_region
    _
  $region5: #{tpu_custom_call.1} parent=0 // pred_fallthru
    _
  // Predicated region
  $region6: #{tpu_custom_call.1} parent=0 // pred_check
    _
  $region7: #{tpu_custom_call.1} parent=0 // pred_check_branch
    %11 = sbr.rel (0) target = $region9
  $region8: #{tpu_custom_call.1} parent=0 // pred_region
    _
  $region9: #{tpu_custom_call.1} parent=0 // pred_fallthru
    _
  // Predicated region
  $region10: #{tpu_custom_call.1} parent=0 // pred_check
    _
  $region11: #{tpu_custom_call.1} parent=0 // pred_check_branch
    %13 = sbr.rel (0) target = $region13
  $region12: #{tpu_custom_call.1} parent=0 // pred_region
    _
  $region13: #{tpu_custom_call.1} parent=0 // pred_fallthru
    _
  %v15 = vld [vmem:[%s0] sm:$0xf]
  %v16 = vld [vmem:[%s0 + $0x4] sm:$0xf]
  %v17 = vld [vmem:[%s0 + $0x8] sm:$0xf]
  %v18 = vld [vmem:[%s0 + $0xc] sm:$0xf]
  %v19 = vld [vmem:[%s0 + $0x10] sm:$0xf]
  %v20 = vld [vmem:[%s0 + $0x14] sm:$0xf]
  %v21 = vld [vmem:[%s0 + $0x18] sm:$0xf]
  %v22 = vld [vmem:[%s0 + $0x1c] sm:$0xf]
  %v23 = vld [vmem:[%s0 + $0x20] sm:$0xf]
  %v24 = vld [vmem:[%s0 + $0x24] sm:$0xf]
  %v25 = vld [vmem:[%s0 + $0x28] sm:$0xf]
  %v26 = vld [vmem:[%s0 + $0x2c] sm:$0xf]
  %v27 = vld [vmem:[%s0 + $0x30] sm:$0xf]
  %v28 = vld [vmem:[%s0 + $0x34] sm:$0xf]
  %v29 = vld [vmem:[%s0 + $0x38] sm:$0xf]
  %v30 = vld [vmem:[%s0 + $0x3c] sm:$0xf]
  %v31 = vld [vmem:[%s0 + $0x40] sm:$0xf]
  %v32 = vld [vmem:[%s0 + $0x44] sm:$0xf]
  %v33 = vld [vmem:[%s0 + $0x48] sm:$0xf]
  %v34 = vld [vmem:[%s0 + $0x4c] sm:$0xf]
  %v35 = vld [vmem:[%s0 + $0x50] sm:$0xf]
  %v36 = vld [vmem:[%s0 + $0x54] sm:$0xf]
  %v37 = vld [vmem:[%s0 + $0x58] sm:$0xf]
  %v38 = vld [vmem:[%s0 + $0x5c] sm:$0xf]
  %v39 = vld [vmem:[%s0 + $0x60] sm:$0xf]
  %v40 = vld [vmem:[%s0 + $0x64] sm:$0xf]
  %v41 = vld [vmem:[%s0 + $0x68] sm:$0xf]
  %v42 = vld [vmem:[%s0 + $0x6c] sm:$0xf]
  %v43 = vld [vmem:[%s0 + $0x70] sm:$0xf]
  %v44 = vld [vmem:[%s0 + $0x74] sm:$0xf]
  %v45 = vld [vmem:[%s0 + $0x78] sm:$0xf]
  %v46 = vld [vmem:[%s0 + $0x7c] sm:$0xf]
  %v47 = vld [vmem:[%s0 + $0x80] sm:$0xf]
  %v48 = vld [vmem:[%s0 + $0x84] sm:$0xf]
  %v49 = vld [vmem:[%s0 + $0x88] sm:$0xf]
  %v50 = vld [vmem:[%s0 + $0x8c] sm:$0xf]
  %v51 = vld [vmem:[%s0 + $0x90] sm:$0xf]
  %v52 = vld [vmem:[%s0 + $0x94] sm:$0xf]
  %v53 = vld [vmem:[%s0 + $0x98] sm:$0xf]
  %v54 = vld [vmem:[%s0 + $0x9c] sm:$0xf]
  %v55 = vld [vmem:[%s0 + $0xa0] sm:$0xf]
  %v56 = vld [vmem:[%s0 + $0xa4] sm:$0xf]
  %v57 = vld [vmem:[%s0 + $0xa8] sm:$0xf]
  %v58 = vld [vmem:[%s0 + $0xac] sm:$0xf]
  %v59 = vld [vmem:[%s0 + $0xb0] sm:$0xf]
  %v60 = vld [vmem:[%s0 + $0xb4] sm:$0xf]
  %v61 = vld [vmem:[%s0 + $0xb8] sm:$0xf]
  %v62 = vld [vmem:[%s0 + $0xbc] sm:$0xf]
  %v63 = vld [vmem:[%s0 + $0xc0] sm:$0xf]
  %v64 = vld [vmem:[%s0 + $0xc4] sm:$0xf]
  %v65 = vld [vmem:[%s0 + $0xc8] sm:$0xf]
  %v66 = vld [vmem:[%s0 + $0xcc] sm:$0xf]
  %v67 = vld [vmem:[%s0 + $0xd0] sm:$0xf]
  %v68 = vld [vmem:[%s0 + $0xd4] sm:$0xf]
  %v69 = vld [vmem:[%s0 + $0xd8] sm:$0xf]
  %v70 = vld [vmem:[%s0 + $0xdc] sm:$0xf]
  %v71 = vld [vmem:[%s0 + $0xe0] sm:$0xf]
  %v72 = vld [vmem:[%s0 + $0xe4] sm:$0xf]
  %v73 = vld [vmem:[%s0 + $0xe8] sm:$0xf]
  %v74 = vld [vmem:[%s0 + $0xec] sm:$0xf]
  %v75 = vld [vmem:[%s0 + $0xf0] sm:$0xf]
  %v76 = vld [vmem:[%s0 + $0xf4] sm:$0xf]
  %v77 = vld [vmem:[%s0 + $0xf8] sm:$0xf]
  %v78 = vld [vmem:[%s0 + $0xfc] sm:$0xf]
  %v79 = vld [vmem:[%s0 + $0x100] sm:$0xf]
  %v80 = vld [vmem:[%s0 + $0x104] sm:$0xf]
  %v81 = vld [vmem:[%s0 + $0x108] sm:$0xf]
  %v82 = vld [vmem:[%s0 + $0x10c] sm:$0xf]
  %v83 = vld [vmem:[%s0 + $0x110] sm:$0xf]
  %v84 = vld [vmem:[%s0 + $0x114] sm:$0xf]
  %v85 = vld [vmem:[%s0 + $0x118] sm:$0xf]
  %v86 = vld [vmem:[%s0 + $0x11c] sm:$0xf]
  %v87 = vld [vmem:[%s0 + $0x120] sm:$0xf]
  %v88 = vld [vmem:[%s0 + $0x124] sm:$0xf]
  %v89 = vld [vmem:[%s0 + $0x128] sm:$0xf]
  %v90 = vld [vmem:[%s0 + $0x12c] sm:$0xf]
  %v91 = vld [vmem:[%s0 + $0x130] sm:$0xf]
  %v92 = vld [vmem:[%s0 + $0x134] sm:$0xf]
  %v93 = vld [vmem:[%s0 + $0x138] sm:$0xf]
  %v94 = vld [vmem:[%s0 + $0x13c] sm:$0xf]
  %v95 = vld [vmem:[%s0 + $0x140] sm:$0xf]
  %v96 = vld [vmem:[%s0 + $0x144] sm:$0xf]
  %v97 = vld [vmem:[%s0 + $0x148] sm:$0xf]
  %v98 = vld [vmem:[%s0 + $0x14c] sm:$0xf]
  %v99 = vld [vmem:[%s0 + $0x150] sm:$0xf]
  %v100 = vld [vmem:[%s0 + $0x154] sm:$0xf]
  %v101 = vld [vmem:[%s0 + $0x158] sm:$0xf]
  %v102 = vld [vmem:[%s0 + $0x15c] sm:$0xf]
  %v103 = vld [vmem:[%s0 + $0x160] sm:$0xf]
  %v104 = vld [vmem:[%s0 + $0x164] sm:$0xf]
  %v105 = vld [vmem:[%s0 + $0x168] sm:$0xf]
  %v106 = vld [vmem:[%s0 + $0x16c] sm:$0xf]
  %v107 = vld [vmem:[%s0 + $0x170] sm:$0xf]
  %v108 = vld [vmem:[%s0 + $0x174] sm:$0xf]
  %v109 = vld [vmem:[%s0 + $0x178] sm:$0xf]
  %v110 = vld [vmem:[%s0 + $0x17c] sm:$0xf]
  %v111 = vld [vmem:[%s0 + $0x180] sm:$0xf]
  %v112 = vld [vmem:[%s0 + $0x184] sm:$0xf]
  %v113 = vld [vmem:[%s0 + $0x188] sm:$0xf]
  %v114 = vld [vmem:[%s0 + $0x18c] sm:$0xf]
  %v115 = vld [vmem:[%s0 + $0x190] sm:$0xf]
  %v116 = vld [vmem:[%s0 + $0x194] sm:$0xf]
  %v117 = vld [vmem:[%s0 + $0x198] sm:$0xf]
  %v118 = vld [vmem:[%s0 + $0x19c] sm:$0xf]
  %v119 = vld [vmem:[%s0 + $0x1a0] sm:$0xf]
  %v120 = vld [vmem:[%s0 + $0x1a4] sm:$0xf]
  %v121 = vld [vmem:[%s0 + $0x1a8] sm:$0xf]
  %v122 = vld [vmem:[%s0 + $0x1ac] sm:$0xf]
  %v123 = vld [vmem:[%s0 + $0x1b0] sm:$0xf]
  %v124 = vld [vmem:[%s0 + $0x1b4] sm:$0xf]
  %v125 = vld [vmem:[%s0 + $0x1b8] sm:$0xf]
  %v126 = vld [vmem:[%s0 + $0x1bc] sm:$0xf]
  %v127 = vld [vmem:[%s0 + $0x1c0] sm:$0xf]
  %v128 = vld [vmem:[%s0 + $0x1c4] sm:$0xf]
  %v129 = vld [vmem:[%s0 + $0x1c8] sm:$0xf]
  %v130 = vld [vmem:[%s0 + $0x1cc] sm:$0xf]
  %v131 = vld [vmem:[%s0 + $0x1d0] sm:$0xf]
  %v132 = vld [vmem:[%s0 + $0x1d4] sm:$0xf]
  %v133 = vld [vmem:[%s0 + $0x1d8] sm:$0xf]
  %v134 = vld [vmem:[%s0 + $0x1dc] sm:$0xf]
  %v135 = vld [vmem:[%s0 + $0x1e0] sm:$0xf]
  %v136 = vld [vmem:[%s0 + $0x1e4] sm:$0xf]
  %v137 = vld [vmem:[%s0 + $0x1e8] sm:$0xf]
  %v138 = vld [vmem:[%s0 + $0x1ec] sm:$0xf]
  %v139 = vld [vmem:[%s0 + $0x1f0] sm:$0xf]
  %v140 = vld [vmem:[%s0 + $0x1f4] sm:$0xf]
  %v141 = vld [vmem:[%s0 + $0x1f8] sm:$0xf]
  %v142 = vld [vmem:[%s0 + $0x1fc] sm:$0xf]
  %v143 = vld [vmem:[%s0 + $0x200] sm:$0xf]
  %v144 = vld [vmem:[%s0 + $0x204] sm:$0xf]
  %v145 = vld [vmem:[%s0 + $0x208] sm:$0xf]
  %v146 = vld [vmem:[%s0 + $0x20c] sm:$0xf]
  %v147 = vld [vmem:[%s0 + $0x210] sm:$0xf]
  %v148 = vld [vmem:[%s0 + $0x214] sm:$0xf]
  %v149 = vld [vmem:[%s0 + $0x218] sm:$0xf]
  %v150 = vld [vmem:[%s0 + $0x21c] sm:$0xf]
  %v151 = vld [vmem:[%s0 + $0x220] sm:$0xf]
  %v152 = vld [vmem:[%s0 + $0x224] sm:$0xf]
  %v153 = vld [vmem:[%s0 + $0x228] sm:$0xf]
  %v154 = vld [vmem:[%s0 + $0x22c] sm:$0xf]
  %v155 = vld [vmem:[%s0 + $0x230] sm:$0xf]
  %v156 = vld [vmem:[%s0 + $0x234] sm:$0xf]
  %v157 = vld [vmem:[%s0 + $0x238] sm:$0xf]
  %v158 = vld [vmem:[%s0 + $0x23c] sm:$0xf]
  %v159 = vld [vmem:[%s0 + $0x240] sm:$0xf]
  %v160 = vld [vmem:[%s0 + $0x244] sm:$0xf]
  %v161 = vld [vmem:[%s0 + $0x248] sm:$0xf]
  %v162 = vld [vmem:[%s0 + $0x24c] sm:$0xf]
  %v163 = vld [vmem:[%s0 + $0x250] sm:$0xf]
  %v164 = vld [vmem:[%s0 + $0x254] sm:$0xf]
  %v165 = vld [vmem:[%s0 + $0x258] sm:$0xf]
  %v166 = vld [vmem:[%s0 + $0x25c] sm:$0xf]
  %v167 = vld [vmem:[%s0 + $0x260] sm:$0xf]
  %v168 = vld [vmem:[%s0 + $0x264] sm:$0xf]
  %v169 = vld [vmem:[%s0 + $0x268] sm:$0xf]
  %v170 = vld [vmem:[%s0 + $0x26c] sm:$0xf]
  %v171 = vld [vmem:[%s0 + $0x270] sm:$0xf]
  %v172 = vld [vmem:[%s0 + $0x274] sm:$0xf]
  %v173 = vld [vmem:[%s0 + $0x278] sm:$0xf]
  %v174 = vld [vmem:[%s0 + $0x27c] sm:$0xf]
  %v175 = vld [vmem:[%s0 + $0x280] sm:$0xf]
  %v176 = vld [vmem:[%s0 + $0x284] sm:$0xf]
  %v177 = vld [vmem:[%s0 + $0x288] sm:$0xf]
  %v178 = vld [vmem:[%s0 + $0x28c] sm:$0xf]
  %v179 = vld [vmem:[%s0 + $0x290] sm:$0xf]
  %v180 = vld [vmem:[%s0 + $0x294] sm:$0xf]
  %v181 = vld [vmem:[%s0 + $0x298] sm:$0xf]
  %v182 = vld [vmem:[%s0 + $0x29c] sm:$0xf]
  %v183 = vld [vmem:[%s0 + $0x2a0] sm:$0xf]
  %v184 = vld [vmem:[%s0 + $0x2a4] sm:$0xf]
  %v185 = vld [vmem:[%s0 + $0x2a8] sm:$0xf]
  %v186 = vld [vmem:[%s0 + $0x2ac] sm:$0xf]
  %v187 = vld [vmem:[%s0 + $0x2b0] sm:$0xf]
  %v188 = vld [vmem:[%s0 + $0x2b4] sm:$0xf]
  %v189 = vld [vmem:[%s0 + $0x2b8] sm:$0xf]
  %v190 = vld [vmem:[%s0 + $0x2bc] sm:$0xf]
  %v191 = vld [vmem:[%s0 + $0x2c0] sm:$0xf]
  %v192 = vld [vmem:[%s0 + $0x2c4] sm:$0xf]
  %v193 = vld [vmem:[%s0 + $0x2c8] sm:$0xf]
  %v194 = vld [vmem:[%s0 + $0x2cc] sm:$0xf]
  %v195 = vld [vmem:[%s0 + $0x2d0] sm:$0xf]
  %v196 = vld [vmem:[%s0 + $0x2d4] sm:$0xf]
  %v197 = vld [vmem:[%s0 + $0x2d8] sm:$0xf]
  %v198 = vld [vmem:[%s0 + $0x2dc] sm:$0xf]
  %v199 = vld [vmem:[%s0 + $0x2e0] sm:$0xf]
  %v200 = vld [vmem:[%s0 + $0x2e4] sm:$0xf]
  %v201 = vld [vmem:[%s0 + $0x2e8] sm:$0xf]
  %v202 = vld [vmem:[%s0 + $0x2ec] sm:$0xf]
  %v203 = vld [vmem:[%s0 + $0x2f0] sm:$0xf]
  %v204 = vld [vmem:[%s0 + $0x2f4] sm:$0xf]
  %v205 = vld [vmem:[%s0 + $0x2f8] sm:$0xf]
  %v206 = vld [vmem:[%s0 + $0x2fc] sm:$0xf]
  %v207 = vld [vmem:[%s0 + $0x300] sm:$0xf]
  %v208 = vld [vmem:[%s0 + $0x304] sm:$0xf]
  %v209 = vld [vmem:[%s0 + $0x308] sm:$0xf]
  %v210 = vld [vmem:[%s0 + $0x30c] sm:$0xf]
  %v211 = vld [vmem:[%s0 + $0x310] sm:$0xf]
  %v212 = vld [vmem:[%s0 + $0x314] sm:$0xf]
  %v213 = vld [vmem:[%s0 + $0x318] sm:$0xf]
  %v214 = vld [vmem:[%s0 + $0x31c] sm:$0xf]
  %v215 = vld [vmem:[%s0 + $0x320] sm:$0xf]
  %v216 = vld [vmem:[%s0 + $0x324] sm:$0xf]
  %v217 = vld [vmem:[%s0 + $0x328] sm:$0xf]
  %v218 = vld [vmem:[%s0 + $0x32c] sm:$0xf]
  %v219 = vld [vmem:[%s0 + $0x330] sm:$0xf]
  %v220 = vld [vmem:[%s0 + $0x334] sm:$0xf]
  %v221 = vld [vmem:[%s0 + $0x338] sm:$0xf]
  %v222 = vld [vmem:[%s0 + $0x33c] sm:$0xf]
  %v223 = vld [vmem:[%s0 + $0x340] sm:$0xf]
  %v224 = vld [vmem:[%s0 + $0x344] sm:$0xf]
  %v225 = vld [vmem:[%s0 + $0x348] sm:$0xf]
  %v226 = vld [vmem:[%s0 + $0x34c] sm:$0xf]
  %v227 = vld [vmem:[%s0 + $0x350] sm:$0xf]
  %v228 = vld [vmem:[%s0 + $0x354] sm:$0xf]
  %v229 = vld [vmem:[%s0 + $0x358] sm:$0xf]
  %v230 = vld [vmem:[%s0 + $0x35c] sm:$0xf]
  %v231 = vld [vmem:[%s0 + $0x360] sm:$0xf]
  %v232 = vld [vmem:[%s0 + $0x364] sm:$0xf]
  %v233 = vld [vmem:[%s0 + $0x368] sm:$0xf]
  %v234 = vld [vmem:[%s0 + $0x36c] sm:$0xf]
  %v235 = vld [vmem:[%s0 + $0x370] sm:$0xf]
  %v236 = vld [vmem:[%s0 + $0x374] sm:$0xf]
  %v237 = vld [vmem:[%s0 + $0x378] sm:$0xf]
  %v238 = vld [vmem:[%s0 + $0x37c] sm:$0xf]
  %v239 = vld [vmem:[%s0 + $0x380] sm:$0xf]
  %v240 = vld [vmem:[%s0 + $0x384] sm:$0xf]
  %v241 = vld [vmem:[%s0 + $0x388] sm:$0xf]
  %v242 = vld [vmem:[%s0 + $0x38c] sm:$0xf]
  %v243 = vld [vmem:[%s0 + $0x390] sm:$0xf]
  %v244 = vld [vmem:[%s0 + $0x394] sm:$0xf]
  %v245 = vld [vmem:[%s0 + $0x398] sm:$0xf]
  %v246 = vld [vmem:[%s0 + $0x39c] sm:$0xf]
  %v247 = vld [vmem:[%s0 + $0x3a0] sm:$0xf]
  %v248 = vld [vmem:[%s0 + $0x3a4] sm:$0xf]
  %v249 = vld [vmem:[%s0 + $0x3a8] sm:$0xf]
  %v250 = vld [vmem:[%s0 + $0x3ac] sm:$0xf]
  %v251 = vld [vmem:[%s0 + $0x3b0] sm:$0xf]
  %v252 = vld [vmem:[%s0 + $0x3b4] sm:$0xf]
  %v253 = vld [vmem:[%s0 + $0x3b8] sm:$0xf]
  %v254 = vld [vmem:[%s0 + $0x3bc] sm:$0xf]
  %v255 = vld [vmem:[%s0 + $0x3c0] sm:$0xf]
  %v256 = vld [vmem:[%s0 + $0x3c4] sm:$0xf]
  %v257 = vld [vmem:[%s0 + $0x3c8] sm:$0xf]
  %v258 = vld [vmem:[%s0 + $0x3cc] sm:$0xf]
  %v259 = vld [vmem:[%s0 + $0x3d0] sm:$0xf]
  %v260 = vld [vmem:[%s0 + $0x3d4] sm:$0xf]
  %v261 = vld [vmem:[%s0 + $0x3d8] sm:$0xf]
  %v262 = vld [vmem:[%s0 + $0x3dc] sm:$0xf]
  %v263 = vld [vmem:[%s0 + $0x3e0] sm:$0xf]
  %v264 = vld [vmem:[%s0 + $0x3e4] sm:$0xf]
  %v265 = vld [vmem:[%s0 + $0x3e8] sm:$0xf]
  %v266 = vld [vmem:[%s0 + $0x3ec] sm:$0xf]
  %v267 = vld [vmem:[%s0 + $0x3f0] sm:$0xf]
  %v268 = vld [vmem:[%s0 + $0x3f4] sm:$0xf]
  %v269 = vld [vmem:[%s0 + $0x3f8] sm:$0xf]
  %v270 = vld [vmem:[%s0 + $0x3fc] sm:$0xf]
  %v271 = vld [vmem:[%s1] sm:$0xf]
  %v272 = vld [vmem:[%s1 + $0x4] sm:$0xf]
  %v273 = vld [vmem:[%s2] sm:$0x1]
  %v275 = vlaneseq
  %v276 = vshrl.u32 %v275, 7
  %v277 = vsub.s32 0, %v276
  %v278 = vrot.slane %v273, %v277
  %v536 = vunpack.c.l.b16 %v15
  %v537 = vunpack.c.l.b16 %v16
  %v538 = vunpack.c.l.b16 %v17
  %v539 = vunpack.c.l.b16 %v18
  %v540 = vunpack.c.l.b16 %v19
  %v541 = vunpack.c.l.b16 %v20
  %v542 = vunpack.c.l.b16 %v21
  %v543 = vunpack.c.l.b16 %v22
  %v544 = vunpack.c.l.b16 %v23
  %v545 = vunpack.c.l.b16 %v24
  %v546 = vunpack.c.l.b16 %v25
  %v547 = vunpack.c.l.b16 %v26
  %v548 = vunpack.c.l.b16 %v27
  %v549 = vunpack.c.l.b16 %v28
  %v550 = vunpack.c.l.b16 %v29
  %v551 = vunpack.c.l.b16 %v30
  %v552 = vunpack.c.l.b16 %v31
  %v553 = vunpack.c.l.b16 %v32
  %v554 = vunpack.c.l.b16 %v33
  %v555 = vunpack.c.l.b16 %v34
  %v556 = vunpack.c.l.b16 %v35
  %v557 = vunpack.c.l.b16 %v36
  %v558 = vunpack.c.l.b16 %v37
  %v559 = vunpack.c.l.b16 %v38
  %v560 = vunpack.c.l.b16 %v39
  %v561 = vunpack.c.l.b16 %v40
  %v562 = vunpack.c.l.b16 %v41
  %v563 = vunpack.c.l.b16 %v42
  %v564 = vunpack.c.l.b16 %v43
  %v565 = vunpack.c.l.b16 %v44
  %v566 = vunpack.c.l.b16 %v45
  %v567 = vunpack.c.l.b16 %v46
  %v568 = vunpack.c.l.b16 %v47
  %v569 = vunpack.c.l.b16 %v48
  %v570 = vunpack.c.l.b16 %v49
  %v571 = vunpack.c.l.b16 %v50
  %v572 = vunpack.c.l.b16 %v51
  %v573 = vunpack.c.l.b16 %v52
  %v574 = vunpack.c.l.b16 %v53
  %v575 = vunpack.c.l.b16 %v54
  %v576 = vunpack.c.l.b16 %v55
  %v577 = vunpack.c.l.b16 %v56
  %v578 = vunpack.c.l.b16 %v57
  %v579 = vunpack.c.l.b16 %v58
  %v580 = vunpack.c.l.b16 %v59
  %v581 = vunpack.c.l.b16 %v60
  %v582 = vunpack.c.l.b16 %v61
  %v583 = vunpack.c.l.b16 %v62
  %v584 = vunpack.c.l.b16 %v63
  %v585 = vunpack.c.l.b16 %v64
  %v586 = vunpack.c.l.b16 %v65
  %v587 = vunpack.c.l.b16 %v66
  %v588 = vunpack.c.l.b16 %v67
  %v589 = vunpack.c.l.b16 %v68
  %v590 = vunpack.c.l.b16 %v69
  %v591 = vunpack.c.l.b16 %v70
  %v592 = vunpack.c.l.b16 %v71
  %v593 = vunpack.c.l.b16 %v72
  %v594 = vunpack.c.l.b16 %v73
  %v595 = vunpack.c.l.b16 %v74
  %v596 = vunpack.c.l.b16 %v75
  %v597 = vunpack.c.l.b16 %v76
  %v598 = vunpack.c.l.b16 %v77
  %v599 = vunpack.c.l.b16 %v78
  %v600 = vunpack.c.l.b16 %v79
  %v601 = vunpack.c.l.b16 %v80
  %v602 = vunpack.c.l.b16 %v81
  %v603 = vunpack.c.l.b16 %v82
  %v604 = vunpack.c.l.b16 %v83
  %v605 = vunpack.c.l.b16 %v84
  %v606 = vunpack.c.l.b16 %v85
  %v607 = vunpack.c.l.b16 %v86
  %v608 = vunpack.c.l.b16 %v87
  %v609 = vunpack.c.l.b16 %v88
  %v610 = vunpack.c.l.b16 %v89
  %v611 = vunpack.c.l.b16 %v90
  %v612 = vunpack.c.l.b16 %v91
  %v613 = vunpack.c.l.b16 %v92
  %v614 = vunpack.c.l.b16 %v93
  %v615 = vunpack.c.l.b16 %v94
  %v616 = vunpack.c.l.b16 %v95
  %v617 = vunpack.c.l.b16 %v96
  %v618 = vunpack.c.l.b16 %v97
  %v619 = vunpack.c.l.b16 %v98
  %v620 = vunpack.c.l.b16 %v99
  %v621 = vunpack.c.l.b16 %v100
  %v622 = vunpack.c.l.b16 %v101
  %v623 = vunpack.c.l.b16 %v102
  %v624 = vunpack.c.l.b16 %v103
  %v625 = vunpack.c.l.b16 %v104
  %v626 = vunpack.c.l.b16 %v105
  %v627 = vunpack.c.l.b16 %v106
  %v628 = vunpack.c.l.b16 %v107
  %v629 = vunpack.c.l.b16 %v108
  %v630 = vunpack.c.l.b16 %v109
  %v631 = vunpack.c.l.b16 %v110
  %v632 = vunpack.c.l.b16 %v111
  %v633 = vunpack.c.l.b16 %v112
  %v634 = vunpack.c.l.b16 %v113
  %v635 = vunpack.c.l.b16 %v114
  %v636 = vunpack.c.l.b16 %v115
  %v637 = vunpack.c.l.b16 %v116
  %v638 = vunpack.c.l.b16 %v117
  %v639 = vunpack.c.l.b16 %v118
  %v640 = vunpack.c.l.b16 %v119
  %v641 = vunpack.c.l.b16 %v120
  %v642 = vunpack.c.l.b16 %v121
  %v643 = vunpack.c.l.b16 %v122
  %v644 = vunpack.c.l.b16 %v123
  %v645 = vunpack.c.l.b16 %v124
  %v646 = vunpack.c.l.b16 %v125
  %v647 = vunpack.c.l.b16 %v126
  %v648 = vunpack.c.l.b16 %v127
  %v649 = vunpack.c.l.b16 %v128
  %v650 = vunpack.c.l.b16 %v129
  %v651 = vunpack.c.l.b16 %v130
  %v652 = vunpack.c.l.b16 %v131
  %v653 = vunpack.c.l.b16 %v132
  %v654 = vunpack.c.l.b16 %v133
  %v655 = vunpack.c.l.b16 %v134
  %v656 = vunpack.c.l.b16 %v135
  %v657 = vunpack.c.l.b16 %v136
  %v658 = vunpack.c.l.b16 %v137
  %v659 = vunpack.c.l.b16 %v138
  %v660 = vunpack.c.l.b16 %v139
  %v661 = vunpack.c.l.b16 %v140
  %v662 = vunpack.c.l.b16 %v141
  %v663 = vunpack.c.l.b16 %v142
  %v664 = vunpack.c.l.b16 %v143
  %v665 = vunpack.c.l.b16 %v144
  %v666 = vunpack.c.l.b16 %v145
  %v667 = vunpack.c.l.b16 %v146
  %v668 = vunpack.c.l.b16 %v147
  %v669 = vunpack.c.l.b16 %v148
  %v670 = vunpack.c.l.b16 %v149
  %v671 = vunpack.c.l.b16 %v150
  %v672 = vunpack.c.l.b16 %v151
  %v673 = vunpack.c.l.b16 %v152
  %v674 = vunpack.c.l.b16 %v153
  %v675 = vunpack.c.l.b16 %v154
  %v676 = vunpack.c.l.b16 %v155
  %v677 = vunpack.c.l.b16 %v156
  %v678 = vunpack.c.l.b16 %v157
  %v679 = vunpack.c.l.b16 %v158
  %v680 = vunpack.c.l.b16 %v159
  %v681 = vunpack.c.l.b16 %v160
  %v682 = vunpack.c.l.b16 %v161
  %v683 = vunpack.c.l.b16 %v162
  %v684 = vunpack.c.l.b16 %v163
  %v685 = vunpack.c.l.b16 %v164
  %v686 = vunpack.c.l.b16 %v165
  %v687 = vunpack.c.l.b16 %v166
  %v688 = vunpack.c.l.b16 %v167
  %v689 = vunpack.c.l.b16 %v168
  %v690 = vunpack.c.l.b16 %v169
  %v691 = vunpack.c.l.b16 %v170
  %v692 = vunpack.c.l.b16 %v171
  %v693 = vunpack.c.l.b16 %v172
  %v694 = vunpack.c.l.b16 %v173
  %v695 = vunpack.c.l.b16 %v174
  %v696 = vunpack.c.l.b16 %v175
  %v697 = vunpack.c.l.b16 %v176
  %v698 = vunpack.c.l.b16 %v177
  %v699 = vunpack.c.l.b16 %v178
  %v700 = vunpack.c.l.b16 %v179
  %v701 = vunpack.c.l.b16 %v180
  %v702 = vunpack.c.l.b16 %v181
  %v703 = vunpack.c.l.b16 %v182
  %v704 = vunpack.c.l.b16 %v183
  %v705 = vunpack.c.l.b16 %v184
  %v706 = vunpack.c.l.b16 %v185
  %v707 = vunpack.c.l.b16 %v186
  %v708 = vunpack.c.l.b16 %v187
  %v709 = vunpack.c.l.b16 %v188
  %v710 = vunpack.c.l.b16 %v189
  %v711 = vunpack.c.l.b16 %v190
  %v712 = vunpack.c.l.b16 %v191
  %v713 = vunpack.c.l.b16 %v192
  %v714 = vunpack.c.l.b16 %v193
  %v715 = vunpack.c.l.b16 %v194
  %v716 = vunpack.c.l.b16 %v195
  %v717 = vunpack.c.l.b16 %v196
  %v718 = vunpack.c.l.b16 %v197
  %v719 = vunpack.c.l.b16 %v198
  %v720 = vunpack.c.l.b16 %v199
  %v721 = vunpack.c.l.b16 %v200
  %v722 = vunpack.c.l.b16 %v201
  %v723 = vunpack.c.l.b16 %v202
  %v724 = vunpack.c.l.b16 %v203
  %v725 = vunpack.c.l.b16 %v204
  %v726 = vunpack.c.l.b16 %v205
  %v727 = vunpack.c.l.b16 %v206
  %v728 = vunpack.c.l.b16 %v207
  %v729 = vunpack.c.l.b16 %v208
  %v730 = vunpack.c.l.b16 %v209
  %v731 = vunpack.c.l.b16 %v210
  %v732 = vunpack.c.l.b16 %v211
  %v733 = vunpack.c.l.b16 %v212
  %v734 = vunpack.c.l.b16 %v213
  %v735 = vunpack.c.l.b16 %v214
  %v736 = vunpack.c.l.b16 %v215
  %v737 = vunpack.c.l.b16 %v216
  %v738 = vunpack.c.l.b16 %v217
  %v739 = vunpack.c.l.b16 %v218
  %v740 = vunpack.c.l.b16 %v219
  %v741 = vunpack.c.l.b16 %v220
  %v742 = vunpack.c.l.b16 %v221
  %v743 = vunpack.c.l.b16 %v222
  %v744 = vunpack.c.l.b16 %v223
  %v745 = vunpack.c.l.b16 %v224
  %v746 = vunpack.c.l.b16 %v225
  %v747 = vunpack.c.l.b16 %v226
  %v748 = vunpack.c.l.b16 %v227
  %v749 = vunpack.c.l.b16 %v228
  %v750 = vunpack.c.l.b16 %v229
  %v751 = vunpack.c.l.b16 %v230
  %v752 = vunpack.c.l.b16 %v231
  %v753 = vunpack.c.l.b16 %v232
  %v754 = vunpack.c.l.b16 %v233
  %v755 = vunpack.c.l.b16 %v234
  %v756 = vunpack.c.l.b16 %v235
  %v757 = vunpack.c.l.b16 %v236
  %v758 = vunpack.c.l.b16 %v237
  %v759 = vunpack.c.l.b16 %v238
  %v760 = vunpack.c.l.b16 %v239
  %v761 = vunpack.c.l.b16 %v240
  %v762 = vunpack.c.l.b16 %v241
  %v763 = vunpack.c.l.b16 %v242
  %v764 = vunpack.c.l.b16 %v243
  %v765 = vunpack.c.l.b16 %v244
  %v766 = vunpack.c.l.b16 %v245
  %v767 = vunpack.c.l.b16 %v246
  %v768 = vunpack.c.l.b16 %v247
  %v769 = vunpack.c.l.b16 %v248
  %v770 = vunpack.c.l.b16 %v249
  %v771 = vunpack.c.l.b16 %v250
  %v772 = vunpack.c.l.b16 %v251
  %v773 = vunpack.c.l.b16 %v252
  %v774 = vunpack.c.l.b16 %v253
  %v775 = vunpack.c.l.b16 %v254
  %v776 = vunpack.c.l.b16 %v255
  %v777 = vunpack.c.l.b16 %v256
  %v778 = vunpack.c.l.b16 %v257
  %v779 = vunpack.c.l.b16 %v258
  %v780 = vunpack.c.l.b16 %v259
  %v781 = vunpack.c.l.b16 %v260
  %v782 = vunpack.c.l.b16 %v261
  %v783 = vunpack.c.l.b16 %v262
  %v784 = vunpack.c.l.b16 %v263
  %v785 = vunpack.c.l.b16 %v264
  %v786 = vunpack.c.l.b16 %v265
  %v787 = vunpack.c.l.b16 %v266
  %v788 = vunpack.c.l.b16 %v267
  %v789 = vunpack.c.l.b16 %v268
  %v790 = vunpack.c.l.b16 %v269
  %v791 = vunpack.c.l.b16 %v270
  %v792 = vpack.c.b16 %v537, %v536
  %v793 = vpack.c.b16 %v539, %v538
  %v794 = vpack.c.b16 %v541, %v540
  %v795 = vpack.c.b16 %v543, %v542
  %v796 = vpack.c.b16 %v545, %v544
  %v797 = vpack.c.b16 %v547, %v546
  %v798 = vpack.c.b16 %v549, %v548
  %v799 = vpack.c.b16 %v551, %v550
  %v800 = vpack.c.b16 %v553, %v552
  %v801 = vpack.c.b16 %v555, %v554
  %v802 = vpack.c.b16 %v557, %v556
  %v803 = vpack.c.b16 %v559, %v558
  %v804 = vpack.c.b16 %v561, %v560
  %v805 = vpack.c.b16 %v563, %v562
  %v806 = vpack.c.b16 %v565, %v564
  %v807 = vpack.c.b16 %v567, %v566
  %v808 = vpack.c.b16 %v569, %v568
  %v809 = vpack.c.b16 %v571, %v570
  %v810 = vpack.c.b16 %v573, %v572
  %v811 = vpack.c.b16 %v575, %v574
  %v812 = vpack.c.b16 %v577, %v576
  %v813 = vpack.c.b16 %v579, %v578
  %v814 = vpack.c.b16 %v581, %v580
  %v815 = vpack.c.b16 %v583, %v582
  %v816 = vpack.c.b16 %v585, %v584
  %v817 = vpack.c.b16 %v587, %v586
  %v818 = vpack.c.b16 %v589, %v588
  %v819 = vpack.c.b16 %v591, %v590
  %v820 = vpack.c.b16 %v593, %v592
  %v821 = vpack.c.b16 %v595, %v594
  %v822 = vpack.c.b16 %v597, %v596
  %v823 = vpack.c.b16 %v599, %v598
  %v824 = vpack.c.b16 %v601, %v600
  %v825 = vpack.c.b16 %v603, %v602
  %v826 = vpack.c.b16 %v605, %v604
  %v827 = vpack.c.b16 %v607, %v606
  %v828 = vpack.c.b16 %v609, %v608
  %v829 = vpack.c.b16 %v611, %v610
  %v830 = vpack.c.b16 %v613, %v612
  %v831 = vpack.c.b16 %v615, %v614
  %v832 = vpack.c.b16 %v617, %v616
  %v833 = vpack.c.b16 %v619, %v618
  %v834 = vpack.c.b16 %v621, %v620
  %v835 = vpack.c.b16 %v623, %v622
  %v836 = vpack.c.b16 %v625, %v624
  %v837 = vpack.c.b16 %v627, %v626
  %v838 = vpack.c.b16 %v629, %v628
  %v839 = vpack.c.b16 %v631, %v630
  %v840 = vpack.c.b16 %v633, %v632
  %v841 = vpack.c.b16 %v635, %v634
  %v842 = vpack.c.b16 %v637, %v636
  %v843 = vpack.c.b16 %v639, %v638
  %v844 = vpack.c.b16 %v641, %v640
  %v845 = vpack.c.b16 %v643, %v642
  %v846 = vpack.c.b16 %v645, %v644
  %v847 = vpack.c.b16 %v647, %v646
  %v848 = vpack.c.b16 %v649, %v648
  %v849 = vpack.c.b16 %v651, %v650
  %v850 = vpack.c.b16 %v653, %v652
  %v851 = vpack.c.b16 %v655, %v654
  %v852 = vpack.c.b16 %v657, %v656
  %v853 = vpack.c.b16 %v659, %v658
  %v854 = vpack.c.b16 %v661, %v660
  %v855 = vpack.c.b16 %v663, %v662
  %v856 = vpack.c.b16 %v665, %v664
  %v857 = vpack.c.b16 %v667, %v666
  %v858 = vpack.c.b16 %v669, %v668
  %v859 = vpack.c.b16 %v671, %v670
  %v860 = vpack.c.b16 %v673, %v672
  %v861 = vpack.c.b16 %v675, %v674
  %v862 = vpack.c.b16 %v677, %v676
  %v863 = vpack.c.b16 %v679, %v678
  %v864 = vpack.c.b16 %v681, %v680
  %v865 = vpack.c.b16 %v683, %v682
  %v866 = vpack.c.b16 %v685, %v684
  %v867 = vpack.c.b16 %v687, %v686
  %v868 = vpack.c.b16 %v689, %v688
  %v869 = vpack.c.b16 %v691, %v690
  %v870 = vpack.c.b16 %v693, %v692
  %v871 = vpack.c.b16 %v695, %v694
  %v872 = vpack.c.b16 %v697, %v696
  %v873 = vpack.c.b16 %v699, %v698
  %v874 = vpack.c.b16 %v701, %v700
  %v875 = vpack.c.b16 %v703, %v702
  %v876 = vpack.c.b16 %v705, %v704
  %v877 = vpack.c.b16 %v707, %v706
  %v878 = vpack.c.b16 %v709, %v708
  %v879 = vpack.c.b16 %v711, %v710
  %v880 = vpack.c.b16 %v713, %v712
  %v881 = vpack.c.b16 %v715, %v714
  %v882 = vpack.c.b16 %v717, %v716
  %v883 = vpack.c.b16 %v719, %v718
  %v884 = vpack.c.b16 %v721, %v720
  %v885 = vpack.c.b16 %v723, %v722
  %v886 = vpack.c.b16 %v725, %v724
  %v887 = vpack.c.b16 %v727, %v726
  %v888 = vpack.c.b16 %v729, %v728
  %v889 = vpack.c.b16 %v731, %v730
  %v890 = vpack.c.b16 %v733, %v732
  %v891 = vpack.c.b16 %v735, %v734
  %v892 = vpack.c.b16 %v737, %v736
  %v893 = vpack.c.b16 %v739, %v738
  %v894 = vpack.c.b16 %v741, %v740
  %v895 = vpack.c.b16 %v743, %v742
  %v896 = vpack.c.b16 %v745, %v744
  %v897 = vpack.c.b16 %v747, %v746
  %v898 = vpack.c.b16 %v749, %v748
  %v899 = vpack.c.b16 %v751, %v750
  %v900 = vpack.c.b16 %v753, %v752
  %v901 = vpack.c.b16 %v755, %v754
  %v902 = vpack.c.b16 %v757, %v756
  %v903 = vpack.c.b16 %v759, %v758
  %v904 = vpack.c.b16 %v761, %v760
  %v905 = vpack.c.b16 %v763, %v762
  %v906 = vpack.c.b16 %v765, %v764
  %v907 = vpack.c.b16 %v767, %v766
  %v908 = vpack.c.b16 %v769, %v768
  %v909 = vpack.c.b16 %v771, %v770
  %v910 = vpack.c.b16 %v773, %v772
  %v911 = vpack.c.b16 %v775, %v774
  %v912 = vpack.c.b16 %v777, %v776
  %v913 = vpack.c.b16 %v779, %v778
  %v914 = vpack.c.b16 %v781, %v780
  %v915 = vpack.c.b16 %v783, %v782
  %v916 = vpack.c.b16 %v785, %v784
  %v917 = vpack.c.b16 %v787, %v786
  %v918 = vpack.c.b16 %v789, %v788
  %v919 = vpack.c.b16 %v791, %v790
  %v922 = vunpack.c.l.b16 %v271
  %v923 = vunpack.c.l.b16 %v272
  %v924 = vpack.c.b16 %v923, %v922
  %vm926 = vcmask 130048
  %v928 = vsel %vm926, %v792, 0
  %v931 = vsel %vm926, %v793, 0
  %v934 = vsel %vm926, %v794, 0
  %v937 = vsel %vm926, %v795, 0
  %v940 = vsel %vm926, %v796, 0
  %v943 = vsel %vm926, %v797, 0
  %v946 = vsel %vm926, %v798, 0
  %v949 = vsel %vm926, %v799, 0
  %v952 = vsel %vm926, %v800, 0
  %v955 = vsel %vm926, %v801, 0
  %v958 = vsel %vm926, %v802, 0
  %v961 = vsel %vm926, %v803, 0
  %v964 = vsel %vm926, %v804, 0
  %v967 = vsel %vm926, %v805, 0
  %v970 = vsel %vm926, %v806, 0
  %v973 = vsel %vm926, %v807, 0
  %v976 = vsel %vm926, %v808, 0
  %v979 = vsel %vm926, %v809, 0
  %v982 = vsel %vm926, %v810, 0
  %v985 = vsel %vm926, %v811, 0
  %v988 = vsel %vm926, %v812, 0
  %v991 = vsel %vm926, %v813, 0
  %v994 = vsel %vm926, %v814, 0
  %v997 = vsel %vm926, %v815, 0
  %v1000 = vsel %vm926, %v816, 0
  %v1003 = vsel %vm926, %v817, 0
  %v1006 = vsel %vm926, %v818, 0
  %v1009 = vsel %vm926, %v819, 0
  %v1012 = vsel %vm926, %v820, 0
  %v1015 = vsel %vm926, %v821, 0
  %v1018 = vsel %vm926, %v822, 0
  %v1021 = vsel %vm926, %v823, 0
  %v1024 = vsel %vm926, %v824, 0
  %v1027 = vsel %vm926, %v825, 0
  %v1030 = vsel %vm926, %v826, 0
  %v1033 = vsel %vm926, %v827, 0
  %v1036 = vsel %vm926, %v828, 0
  %v1039 = vsel %vm926, %v829, 0
  %v1042 = vsel %vm926, %v830, 0
  %v1045 = vsel %vm926, %v831, 0
  %v1048 = vsel %vm926, %v832, 0
  %v1051 = vsel %vm926, %v833, 0
  %v1054 = vsel %vm926, %v834, 0
  %v1057 = vsel %vm926, %v835, 0
  %v1060 = vsel %vm926, %v836, 0
  %v1063 = vsel %vm926, %v837, 0
  %v1066 = vsel %vm926, %v838, 0
  %v1069 = vsel %vm926, %v839, 0
  %v1072 = vsel %vm926, %v840, 0
  %v1075 = vsel %vm926, %v841, 0
  %v1078 = vsel %vm926, %v842, 0
  %v1081 = vsel %vm926, %v843, 0
  %v1084 = vsel %vm926, %v844, 0
  %v1087 = vsel %vm926, %v845, 0
  %v1090 = vsel %vm926, %v846, 0
  %v1093 = vsel %vm926, %v847, 0
  %v1096 = vsel %vm926, %v848, 0
  %v1099 = vsel %vm926, %v849, 0
  %v1102 = vsel %vm926, %v850, 0
  %v1105 = vsel %vm926, %v851, 0
  %v1108 = vsel %vm926, %v852, 0
  %v1111 = vsel %vm926, %v853, 0
  %v1114 = vsel %vm926, %v854, 0
  %v1117 = vsel %vm926, %v855, 0
  %v1120 = vsel %vm926, %v856, 0
  %v1123 = vsel %vm926, %v857, 0
  %v1126 = vsel %vm926, %v858, 0
  %v1129 = vsel %vm926, %v859, 0
  %v1132 = vsel %vm926, %v860, 0
  %v1135 = vsel %vm926, %v861, 0
  %v1138 = vsel %vm926, %v862, 0
  %v1141 = vsel %vm926, %v863, 0
  %v1144 = vsel %vm926, %v864, 0
  %v1147 = vsel %vm926, %v865, 0
  %v1150 = vsel %vm926, %v866, 0
  %v1153 = vsel %vm926, %v867, 0
  %v1156 = vsel %vm926, %v868, 0
  %v1159 = vsel %vm926, %v869, 0
  %v1162 = vsel %vm926, %v870, 0
  %v1165 = vsel %vm926, %v871, 0
  %v1168 = vsel %vm926, %v872, 0
  %v1171 = vsel %vm926, %v873, 0
  %v1174 = vsel %vm926, %v874, 0
  %v1177 = vsel %vm926, %v875, 0
  %v1180 = vsel %vm926, %v876, 0
  %v1183 = vsel %vm926, %v877, 0
  %v1186 = vsel %vm926, %v878, 0
  %v1189 = vsel %vm926, %v879, 0
  %v1192 = vsel %vm926, %v880, 0
  %v1195 = vsel %vm926, %v881, 0
  %v1198 = vsel %vm926, %v882, 0
  %v1201 = vsel %vm926, %v883, 0
  %v1204 = vsel %vm926, %v884, 0
  %v1207 = vsel %vm926, %v885, 0
  %v1210 = vsel %vm926, %v886, 0
  %v1213 = vsel %vm926, %v887, 0
  %v1216 = vsel %vm926, %v888, 0
  %v1219 = vsel %vm926, %v889, 0
  %v1222 = vsel %vm926, %v890, 0
  %v1225 = vsel %vm926, %v891, 0
  %v1228 = vsel %vm926, %v892, 0
  %v1231 = vsel %vm926, %v893, 0
  %v1234 = vsel %vm926, %v894, 0
  %v1237 = vsel %vm926, %v895, 0
  %v1240 = vsel %vm926, %v896, 0
  %v1243 = vsel %vm926, %v897, 0
  %v1246 = vsel %vm926, %v898, 0
  %v1249 = vsel %vm926, %v899, 0
  %v1252 = vsel %vm926, %v900, 0
  %v1255 = vsel %vm926, %v901, 0
  %v1258 = vsel %vm926, %v902, 0
  %v1261 = vsel %vm926, %v903, 0
  %v1264 = vsel %vm926, %v904, 0
  %v1267 = vsel %vm926, %v905, 0
  %v1270 = vsel %vm926, %v906, 0
  %v1273 = vsel %vm926, %v907, 0
  %v1276 = vsel %vm926, %v908, 0
  %v1279 = vsel %vm926, %v909, 0
  %v1282 = vsel %vm926, %v910, 0
  %v1285 = vsel %vm926, %v911, 0
  %v1288 = vsel %vm926, %v912, 0
  %v1291 = vsel %vm926, %v913, 0
  %v1294 = vsel %vm926, %v914, 0
  %v1297 = vsel %vm926, %v915, 0
  %v1300 = vsel %vm926, %v916, 0
  %v1303 = vsel %vm926, %v917, 0
  %v1306 = vsel %vm926, %v918, 0
  %v1309 = vsel %vm926, %v919, 0
  %1311 = vmatprep.subr.bf16.mxu0 0
  %1312 = vmatpush1.bf16.msra.mxu0 0
  %1313 = vmatprep.subr.bf16.mxu0 0
  %1314 = vmatpush1.bf16.msra.mxu0 0
  %1315 = vmatprep.subr.bf16.mxu0 0
  %1316 = vmatpush1.bf16.msra.mxu0 0
  %1317 = vmatprep.subr.bf16.mxu0 0
  %1318 = vmatpush1.bf16.msra.mxu0 0
  %1319 = vmatprep.subr.bf16.mxu0 0
  %1320 = vmatpush1.bf16.msra.mxu0 0
  %1321 = vmatprep.subr.bf16.mxu0 0
  %1322 = vmatpush1.bf16.msra.mxu0 0
  %1323 = vmatprep.subr.bf16.mxu0 0
  %1324 = vmatpush1.bf16.msra.mxu0 0
  %1325 = vmatprep.subr.bf16.mxu0 0
  %1326 = vmatpush1.bf16.msra.mxu0 %v924
  %1327 = vmatprep.subr.bf16.mxu0 0
  %1328 = vmatpush2.bf16.msra.mxu0 0
  %1329 = vmatprep.subr.bf16.mxu0 0
  %1330 = vmatpush2.bf16.msra.mxu0 0
  %1331 = vmatprep.subr.bf16.mxu0 0
  %1332 = vmatpush2.bf16.msra.mxu0 0
  %1333 = vmatprep.subr.bf16.mxu0 0
  %1334 = vmatpush2.bf16.msra.mxu0 0
  %1335 = vmatprep.subr.bf16.mxu0 0
  %1336 = vmatpush2.bf16.msra.mxu0 0
  %1337 = vmatprep.subr.bf16.mxu0 0
  %1338 = vmatpush2.bf16.msra.mxu0 0
  %1339 = vmatprep.subr.bf16.mxu0 0
  %1340 = vmatpush2.bf16.msra.mxu0 0
  %1341 = vmatprep.subr.bf16.mxu0 0
  %1342 = vmatpush2.bf16.msra.mxu0 0
  %1343 = vmatprep.mubr.bf16.mxu0 0
  %1344 = vmatmul.mubr.bf16.gmra.mxu0 %v928
  %v1345 = vpop.f32.mrf.mxu0
  %v1346 = vadd.f32 %v278, %v1345
  %v1347 = vpop.f32.mrf.mxu0
  %v1348 = vpop.f32.mrf.mxu0
  %v1349 = vadd.f32 %v278, %v1348
  %v1350 = vpop.f32.mrf.mxu0
  %1351 = vmatprep.mubr.bf16.mxu0 0
  %1352 = vmatmul.mubr.bf16.gmra.mxu0 %v931
  %v1353 = vpop.f32.mrf.mxu0
  %v1354 = vadd.f32 %v278, %v1353
  %v1355 = vpop.f32.mrf.mxu0
  %v1356 = vpop.f32.mrf.mxu0
  %v1357 = vadd.f32 %v278, %v1356
  %v1358 = vpop.f32.mrf.mxu0
  %1359 = vmatprep.mubr.bf16.mxu0 0
  %1360 = vmatmul.mubr.bf16.gmra.mxu0 %v934
  %v1361 = vpop.f32.mrf.mxu0
  %v1362 = vadd.f32 %v278, %v1361
  %v1363 = vpop.f32.mrf.mxu0
  %v1364 = vpop.f32.mrf.mxu0
  %v1365 = vadd.f32 %v278, %v1364
  %v1366 = vpop.f32.mrf.mxu0
  %1367 = vmatprep.mubr.bf16.mxu0 0
  %1368 = vmatmul.mubr.bf16.gmra.mxu0 %v937
  %v1369 = vpop.f32.mrf.mxu0
  %v1370 = vadd.f32 %v278, %v1369
  %v1371 = vpop.f32.mrf.mxu0
  %v1372 = vpop.f32.mrf.mxu0
  %v1373 = vadd.f32 %v278, %v1372
  %v1374 = vpop.f32.mrf.mxu0
  %1375 = vmatprep.mubr.bf16.mxu0 0
  %1376 = vmatmul.mubr.bf16.gmra.mxu0 %v940
  %v1377 = vpop.f32.mrf.mxu0
  %v1378 = vadd.f32 %v278, %v1377
  %v1379 = vpop.f32.mrf.mxu0
  %v1380 = vpop.f32.mrf.mxu0
  %v1381 = vadd.f32 %v278, %v1380
  %v1382 = vpop.f32.mrf.mxu0
  %1383 = vmatprep.mubr.bf16.mxu0 0
  %1384 = vmatmul.mubr.bf16.gmra.mxu0 %v943
  %v1385 = vpop.f32.mrf.mxu0
  %v1386 = vadd.f32 %v278, %v1385
  %v1387 = vpop.f32.mrf.mxu0
  %v1388 = vpop.f32.mrf.mxu0
  %v1389 = vadd.f32 %v278, %v1388
  %v1390 = vpop.f32.mrf.mxu0
  %1391 = vmatprep.mubr.bf16.mxu0 0
  %1392 = vmatmul.mubr.bf16.gmra.mxu0 %v946
  %v1393 = vpop.f32.mrf.mxu0
  %v1394 = vadd.f32 %v278, %v1393
  %v1395 = vpop.f32.mrf.mxu0
  %v1396 = vpop.f32.mrf.mxu0
  %v1397 = vadd.f32 %v278, %v1396
  %v1398 = vpop.f32.mrf.mxu0
  %1399 = vmatprep.mubr.bf16.mxu0 0
  %1400 = vmatmul.mubr.bf16.gmra.mxu0 %v949
  %v1401 = vpop.f32.mrf.mxu0
  %v1402 = vadd.f32 %v278, %v1401
  %v1403 = vpop.f32.mrf.mxu0
  %v1404 = vpop.f32.mrf.mxu0
  %v1405 = vadd.f32 %v278, %v1404
  %v1406 = vpop.f32.mrf.mxu0
  %1407 = vmatprep.mubr.bf16.mxu0 0
  %1408 = vmatmul.mubr.bf16.gmra.mxu0 %v952
  %v1409 = vpop.f32.mrf.mxu0
  %v1410 = vadd.f32 %v278, %v1409
  %v1411 = vpop.f32.mrf.mxu0
  %v1412 = vpop.f32.mrf.mxu0
  %v1413 = vadd.f32 %v278, %v1412
  %v1414 = vpop.f32.mrf.mxu0
  %1415 = vmatprep.mubr.bf16.mxu0 0
  %1416 = vmatmul.mubr.bf16.gmra.mxu0 %v955
  %v1417 = vpop.f32.mrf.mxu0
  %v1418 = vadd.f32 %v278, %v1417
  %v1419 = vpop.f32.mrf.mxu0
  %v1420 = vpop.f32.mrf.mxu0
  %v1421 = vadd.f32 %v278, %v1420
  %v1422 = vpop.f32.mrf.mxu0
  %1423 = vmatprep.mubr.bf16.mxu0 0
  %1424 = vmatmul.mubr.bf16.gmra.mxu0 %v958
  %v1425 = vpop.f32.mrf.mxu0
  %v1426 = vadd.f32 %v278, %v1425
  %v1427 = vpop.f32.mrf.mxu0
  %v1428 = vpop.f32.mrf.mxu0
  %v1429 = vadd.f32 %v278, %v1428
  %v1430 = vpop.f32.mrf.mxu0
  %1431 = vmatprep.mubr.bf16.mxu0 0
  %1432 = vmatmul.mubr.bf16.gmra.mxu0 %v961
  %v1433 = vpop.f32.mrf.mxu0
  %v1434 = vadd.f32 %v278, %v1433
  %v1435 = vpop.f32.mrf.mxu0
  %v1436 = vpop.f32.mrf.mxu0
  %v1437 = vadd.f32 %v278, %v1436
  %v1438 = vpop.f32.mrf.mxu0
  %1439 = vmatprep.mubr.bf16.mxu0 0
  %1440 = vmatmul.mubr.bf16.gmra.mxu0 %v964
  %v1441 = vpop.f32.mrf.mxu0
  %v1442 = vadd.f32 %v278, %v1441
  %v1443 = vpop.f32.mrf.mxu0
  %v1444 = vpop.f32.mrf.mxu0
  %v1445 = vadd.f32 %v278, %v1444
  %v1446 = vpop.f32.mrf.mxu0
  %1447 = vmatprep.mubr.bf16.mxu0 0
  %1448 = vmatmul.mubr.bf16.gmra.mxu0 %v967
  %v1449 = vpop.f32.mrf.mxu0
  %v1450 = vadd.f32 %v278, %v1449
  %v1451 = vpop.f32.mrf.mxu0
  %v1452 = vpop.f32.mrf.mxu0
  %v1453 = vadd.f32 %v278, %v1452
  %v1454 = vpop.f32.mrf.mxu0
  %1455 = vmatprep.mubr.bf16.mxu0 0
  %1456 = vmatmul.mubr.bf16.gmra.mxu0 %v970
  %v1457 = vpop.f32.mrf.mxu0
  %v1458 = vadd.f32 %v278, %v1457
  %v1459 = vpop.f32.mrf.mxu0
  %v1460 = vpop.f32.mrf.mxu0
  %v1461 = vadd.f32 %v278, %v1460
  %v1462 = vpop.f32.mrf.mxu0
  %1463 = vmatprep.mubr.bf16.mxu0 0
  %1464 = vmatmul.mubr.bf16.gmra.mxu0 %v973
  %v1465 = vpop.f32.mrf.mxu0
  %v1466 = vadd.f32 %v278, %v1465
  %v1467 = vpop.f32.mrf.mxu0
  %v1468 = vpop.f32.mrf.mxu0
  %v1469 = vadd.f32 %v278, %v1468
  %v1470 = vpop.f32.mrf.mxu0
  %1471 = vmatprep.mubr.bf16.mxu0 0
  %1472 = vmatmul.mubr.bf16.gmra.mxu0 %v976
  %v1473 = vpop.f32.mrf.mxu0
  %v1474 = vadd.f32 %v278, %v1473
  %v1475 = vpop.f32.mrf.mxu0
  %v1476 = vpop.f32.mrf.mxu0
  %v1477 = vadd.f32 %v278, %v1476
  %v1478 = vpop.f32.mrf.mxu0
  %1479 = vmatprep.mubr.bf16.mxu0 0
  %1480 = vmatmul.mubr.bf16.gmra.mxu0 %v979
  %v1481 = vpop.f32.mrf.mxu0
  %v1482 = vadd.f32 %v278, %v1481
  %v1483 = vpop.f32.mrf.mxu0
  %v1484 = vpop.f32.mrf.mxu0
  %v1485 = vadd.f32 %v278, %v1484
  %v1486 = vpop.f32.mrf.mxu0
  %1487 = vmatprep.mubr.bf16.mxu0 0
  %1488 = vmatmul.mubr.bf16.gmra.mxu0 %v982
  %v1489 = vpop.f32.mrf.mxu0
  %v1490 = vadd.f32 %v278, %v1489
  %v1491 = vpop.f32.mrf.mxu0
  %v1492 = vpop.f32.mrf.mxu0
  %v1493 = vadd.f32 %v278, %v1492
  %v1494 = vpop.f32.mrf.mxu0
  %1495 = vmatprep.mubr.bf16.mxu0 0
  %1496 = vmatmul.mubr.bf16.gmra.mxu0 %v985
  %v1497 = vpop.f32.mrf.mxu0
  %v1498 = vadd.f32 %v278, %v1497
  %v1499 = vpop.f32.mrf.mxu0
  %v1500 = vpop.f32.mrf.mxu0
  %v1501 = vadd.f32 %v278, %v1500
  %v1502 = vpop.f32.mrf.mxu0
  %1503 = vmatprep.mubr.bf16.mxu0 0
  %1504 = vmatmul.mubr.bf16.gmra.mxu0 %v988
  %v1505 = vpop.f32.mrf.mxu0
  %v1506 = vadd.f32 %v278, %v1505
  %v1507 = vpop.f32.mrf.mxu0
  %v1508 = vpop.f32.mrf.mxu0
  %v1509 = vadd.f32 %v278, %v1508
  %v1510 = vpop.f32.mrf.mxu0
  %1511 = vmatprep.mubr.bf16.mxu0 0
  %1512 = vmatmul.mubr.bf16.gmra.mxu0 %v991
  %v1513 = vpop.f32.mrf.mxu0
  %v1514 = vadd.f32 %v278, %v1513
  %v1515 = vpop.f32.mrf.mxu0
  %v1516 = vpop.f32.mrf.mxu0
  %v1517 = vadd.f32 %v278, %v1516
  %v1518 = vpop.f32.mrf.mxu0
  %1519 = vmatprep.mubr.bf16.mxu0 0
  %1520 = vmatmul.mubr.bf16.gmra.mxu0 %v994
  %v1521 = vpop.f32.mrf.mxu0
  %v1522 = vadd.f32 %v278, %v1521
  %v1523 = vpop.f32.mrf.mxu0
  %v1524 = vpop.f32.mrf.mxu0
  %v1525 = vadd.f32 %v278, %v1524
  %v1526 = vpop.f32.mrf.mxu0
  %1527 = vmatprep.mubr.bf16.mxu0 0
  %1528 = vmatmul.mubr.bf16.gmra.mxu0 %v997
  %v1529 = vpop.f32.mrf.mxu0
  %v1530 = vadd.f32 %v278, %v1529
  %v1531 = vpop.f32.mrf.mxu0
  %v1532 = vpop.f32.mrf.mxu0
  %v1533 = vadd.f32 %v278, %v1532
  %v1534 = vpop.f32.mrf.mxu0
  %1535 = vmatprep.mubr.bf16.mxu0 0
  %1536 = vmatmul.mubr.bf16.gmra.mxu0 %v1000
  %v1537 = vpop.f32.mrf.mxu0
  %v1538 = vadd.f32 %v278, %v1537
  %v1539 = vpop.f32.mrf.mxu0
  %v1540 = vpop.f32.mrf.mxu0
  %v1541 = vadd.f32 %v278, %v1540
  %v1542 = vpop.f32.mrf.mxu0
  %1543 = vmatprep.mubr.bf16.mxu0 0
  %1544 = vmatmul.mubr.bf16.gmra.mxu0 %v1003
  %v1545 = vpop.f32.mrf.mxu0
  %v1546 = vadd.f32 %v278, %v1545
  %v1547 = vpop.f32.mrf.mxu0
  %v1548 = vpop.f32.mrf.mxu0
  %v1549 = vadd.f32 %v278, %v1548
  %v1550 = vpop.f32.mrf.mxu0
  %1551 = vmatprep.mubr.bf16.mxu0 0
  %1552 = vmatmul.mubr.bf16.gmra.mxu0 %v1006
  %v1553 = vpop.f32.mrf.mxu0
  %v1554 = vadd.f32 %v278, %v1553
  %v1555 = vpop.f32.mrf.mxu0
  %v1556 = vpop.f32.mrf.mxu0
  %v1557 = vadd.f32 %v278, %v1556
  %v1558 = vpop.f32.mrf.mxu0
  %1559 = vmatprep.mubr.bf16.mxu0 0
  %1560 = vmatmul.mubr.bf16.gmra.mxu0 %v1009
  %v1561 = vpop.f32.mrf.mxu0
  %v1562 = vadd.f32 %v278, %v1561
  %v1563 = vpop.f32.mrf.mxu0
  %v1564 = vpop.f32.mrf.mxu0
  %v1565 = vadd.f32 %v278, %v1564
  %v1566 = vpop.f32.mrf.mxu0
  %1567 = vmatprep.mubr.bf16.mxu0 0
  %1568 = vmatmul.mubr.bf16.gmra.mxu0 %v1012
  %v1569 = vpop.f32.mrf.mxu0
  %v1570 = vadd.f32 %v278, %v1569
  %v1571 = vpop.f32.mrf.mxu0
  %v1572 = vpop.f32.mrf.mxu0
  %v1573 = vadd.f32 %v278, %v1572
  %v1574 = vpop.f32.mrf.mxu0
  %1575 = vmatprep.mubr.bf16.mxu0 0
  %1576 = vmatmul.mubr.bf16.gmra.mxu0 %v1015
  %v1577 = vpop.f32.mrf.mxu0
  %v1578 = vadd.f32 %v278, %v1577
  %v1579 = vpop.f32.mrf.mxu0
  %v1580 = vpop.f32.mrf.mxu0
  %v1581 = vadd.f32 %v278, %v1580
  %v1582 = vpop.f32.mrf.mxu0
  %1583 = vmatprep.mubr.bf16.mxu0 0
  %1584 = vmatmul.mubr.bf16.gmra.mxu0 %v1018
  %v1585 = vpop.f32.mrf.mxu0
  %v1586 = vadd.f32 %v278, %v1585
  %v1587 = vpop.f32.mrf.mxu0
  %v1588 = vpop.f32.mrf.mxu0
  %v1589 = vadd.f32 %v278, %v1588
  %v1590 = vpop.f32.mrf.mxu0
  %1591 = vmatprep.mubr.bf16.mxu0 0
  %1592 = vmatmul.mubr.bf16.gmra.mxu0 %v1021
  %v1593 = vpop.f32.mrf.mxu0
  %v1594 = vadd.f32 %v278, %v1593
  %v1595 = vpop.f32.mrf.mxu0
  %v1596 = vpop.f32.mrf.mxu0
  %v1597 = vadd.f32 %v278, %v1596
  %v1598 = vpop.f32.mrf.mxu0
  %1599 = vmatprep.mubr.bf16.mxu0 0
  %1600 = vmatmul.mubr.bf16.gmra.mxu0 %v1024
  %v1601 = vpop.f32.mrf.mxu0
  %v1602 = vadd.f32 %v278, %v1601
  %v1603 = vpop.f32.mrf.mxu0
  %v1604 = vpop.f32.mrf.mxu0
  %v1605 = vadd.f32 %v278, %v1604
  %v1606 = vpop.f32.mrf.mxu0
  %1607 = vmatprep.mubr.bf16.mxu0 0
  %1608 = vmatmul.mubr.bf16.gmra.mxu0 %v1027
  %v1609 = vpop.f32.mrf.mxu0
  %v1610 = vadd.f32 %v278, %v1609
  %v1611 = vpop.f32.mrf.mxu0
  %v1612 = vpop.f32.mrf.mxu0
  %v1613 = vadd.f32 %v278, %v1612
  %v1614 = vpop.f32.mrf.mxu0
  %1615 = vmatprep.mubr.bf16.mxu0 0
  %1616 = vmatmul.mubr.bf16.gmra.mxu0 %v1030
  %v1617 = vpop.f32.mrf.mxu0
  %v1618 = vadd.f32 %v278, %v1617
  %v1619 = vpop.f32.mrf.mxu0
  %v1620 = vpop.f32.mrf.mxu0
  %v1621 = vadd.f32 %v278, %v1620
  %v1622 = vpop.f32.mrf.mxu0
  %1623 = vmatprep.mubr.bf16.mxu0 0
  %1624 = vmatmul.mubr.bf16.gmra.mxu0 %v1033
  %v1625 = vpop.f32.mrf.mxu0
  %v1626 = vadd.f32 %v278, %v1625
  %v1627 = vpop.f32.mrf.mxu0
  %v1628 = vpop.f32.mrf.mxu0
  %v1629 = vadd.f32 %v278, %v1628
  %v1630 = vpop.f32.mrf.mxu0
  %1631 = vmatprep.mubr.bf16.mxu0 0
  %1632 = vmatmul.mubr.bf16.gmra.mxu0 %v1036
  %v1633 = vpop.f32.mrf.mxu0
  %v1634 = vadd.f32 %v278, %v1633
  %v1635 = vpop.f32.mrf.mxu0
  %v1636 = vpop.f32.mrf.mxu0
  %v1637 = vadd.f32 %v278, %v1636
  %v1638 = vpop.f32.mrf.mxu0
  %1639 = vmatprep.mubr.bf16.mxu0 0
  %1640 = vmatmul.mubr.bf16.gmra.mxu0 %v1039
  %v1641 = vpop.f32.mrf.mxu0
  %v1642 = vadd.f32 %v278, %v1641
  %v1643 = vpop.f32.mrf.mxu0
  %v1644 = vpop.f32.mrf.mxu0
  %v1645 = vadd.f32 %v278, %v1644
  %v1646 = vpop.f32.mrf.mxu0
  %1647 = vmatprep.mubr.bf16.mxu0 0
  %1648 = vmatmul.mubr.bf16.gmra.mxu0 %v1042
  %v1649 = vpop.f32.mrf.mxu0
  %v1650 = vadd.f32 %v278, %v1649
  %v1651 = vpop.f32.mrf.mxu0
  %v1652 = vpop.f32.mrf.mxu0
  %v1653 = vadd.f32 %v278, %v1652
  %v1654 = vpop.f32.mrf.mxu0
  %1655 = vmatprep.mubr.bf16.mxu0 0
  %1656 = vmatmul.mubr.bf16.gmra.mxu0 %v1045
  %v1657 = vpop.f32.mrf.mxu0
  %v1658 = vadd.f32 %v278, %v1657
  %v1659 = vpop.f32.mrf.mxu0
  %v1660 = vpop.f32.mrf.mxu0
  %v1661 = vadd.f32 %v278, %v1660
  %v1662 = vpop.f32.mrf.mxu0
  %1663 = vmatprep.mubr.bf16.mxu0 0
  %1664 = vmatmul.mubr.bf16.gmra.mxu0 %v1048
  %v1665 = vpop.f32.mrf.mxu0
  %v1666 = vadd.f32 %v278, %v1665
  %v1667 = vpop.f32.mrf.mxu0
  %v1668 = vpop.f32.mrf.mxu0
  %v1669 = vadd.f32 %v278, %v1668
  %v1670 = vpop.f32.mrf.mxu0
  %1671 = vmatprep.mubr.bf16.mxu0 0
  %1672 = vmatmul.mubr.bf16.gmra.mxu0 %v1051
  %v1673 = vpop.f32.mrf.mxu0
  %v1674 = vadd.f32 %v278, %v1673
  %v1675 = vpop.f32.mrf.mxu0
  %v1676 = vpop.f32.mrf.mxu0
  %v1677 = vadd.f32 %v278, %v1676
  %v1678 = vpop.f32.mrf.mxu0
  %1679 = vmatprep.mubr.bf16.mxu0 0
  %1680 = vmatmul.mubr.bf16.gmra.mxu0 %v1054
  %v1681 = vpop.f32.mrf.mxu0
  %v1682 = vadd.f32 %v278, %v1681
  %v1683 = vpop.f32.mrf.mxu0
  %v1684 = vpop.f32.mrf.mxu0
  %v1685 = vadd.f32 %v278, %v1684
  %v1686 = vpop.f32.mrf.mxu0
  %1687 = vmatprep.mubr.bf16.mxu0 0
  %1688 = vmatmul.mubr.bf16.gmra.mxu0 %v1057
  %v1689 = vpop.f32.mrf.mxu0
  %v1690 = vadd.f32 %v278, %v1689
  %v1691 = vpop.f32.mrf.mxu0
  %v1692 = vpop.f32.mrf.mxu0
  %v1693 = vadd.f32 %v278, %v1692
  %v1694 = vpop.f32.mrf.mxu0
  %1695 = vmatprep.mubr.bf16.mxu0 0
  %1696 = vmatmul.mubr.bf16.gmra.mxu0 %v1060
  %v1697 = vpop.f32.mrf.mxu0
  %v1698 = vadd.f32 %v278, %v1697
  %v1699 = vpop.f32.mrf.mxu0
  %v1700 = vpop.f32.mrf.mxu0
  %v1701 = vadd.f32 %v278, %v1700
  %v1702 = vpop.f32.mrf.mxu0
  %1703 = vmatprep.mubr.bf16.mxu0 0
  %1704 = vmatmul.mubr.bf16.gmra.mxu0 %v1063
  %v1705 = vpop.f32.mrf.mxu0
  %v1706 = vadd.f32 %v278, %v1705
  %v1707 = vpop.f32.mrf.mxu0
  %v1708 = vpop.f32.mrf.mxu0
  %v1709 = vadd.f32 %v278, %v1708
  %v1710 = vpop.f32.mrf.mxu0
  %1711 = vmatprep.mubr.bf16.mxu0 0
  %1712 = vmatmul.mubr.bf16.gmra.mxu0 %v1066
  %v1713 = vpop.f32.mrf.mxu0
  %v1714 = vadd.f32 %v278, %v1713
  %v1715 = vpop.f32.mrf.mxu0
  %v1716 = vpop.f32.mrf.mxu0
  %v1717 = vadd.f32 %v278, %v1716
  %v1718 = vpop.f32.mrf.mxu0
  %1719 = vmatprep.mubr.bf16.mxu0 0
  %1720 = vmatmul.mubr.bf16.gmra.mxu0 %v1069
  %v1721 = vpop.f32.mrf.mxu0
  %v1722 = vadd.f32 %v278, %v1721
  %v1723 = vpop.f32.mrf.mxu0
  %v1724 = vpop.f32.mrf.mxu0
  %v1725 = vadd.f32 %v278, %v1724
  %v1726 = vpop.f32.mrf.mxu0
  %1727 = vmatprep.mubr.bf16.mxu0 0
  %1728 = vmatmul.mubr.bf16.gmra.mxu0 %v1072
  %v1729 = vpop.f32.mrf.mxu0
  %v1730 = vadd.f32 %v278, %v1729
  %v1731 = vpop.f32.mrf.mxu0
  %v1732 = vpop.f32.mrf.mxu0
  %v1733 = vadd.f32 %v278, %v1732
  %v1734 = vpop.f32.mrf.mxu0
  %1735 = vmatprep.mubr.bf16.mxu0 0
  %1736 = vmatmul.mubr.bf16.gmra.mxu0 %v1075
  %v1737 = vpop.f32.mrf.mxu0
  %v1738 = vadd.f32 %v278, %v1737
  %v1739 = vpop.f32.mrf.mxu0
  %v1740 = vpop.f32.mrf.mxu0
  %v1741 = vadd.f32 %v278, %v1740
  %v1742 = vpop.f32.mrf.mxu0
  %1743 = vmatprep.mubr.bf16.mxu0 0
  %1744 = vmatmul.mubr.bf16.gmra.mxu0 %v1078
  %v1745 = vpop.f32.mrf.mxu0
  %v1746 = vadd.f32 %v278, %v1745
  %v1747 = vpop.f32.mrf.mxu0
  %v1748 = vpop.f32.mrf.mxu0
  %v1749 = vadd.f32 %v278, %v1748
  %v1750 = vpop.f32.mrf.mxu0
  %1751 = vmatprep.mubr.bf16.mxu0 0
  %1752 = vmatmul.mubr.bf16.gmra.mxu0 %v1081
  %v1753 = vpop.f32.mrf.mxu0
  %v1754 = vadd.f32 %v278, %v1753
  %v1755 = vpop.f32.mrf.mxu0
  %v1756 = vpop.f32.mrf.mxu0
  %v1757 = vadd.f32 %v278, %v1756
  %v1758 = vpop.f32.mrf.mxu0
  %1759 = vmatprep.mubr.bf16.mxu0 0
  %1760 = vmatmul.mubr.bf16.gmra.mxu0 %v1084
  %v1761 = vpop.f32.mrf.mxu0
  %v1762 = vadd.f32 %v278, %v1761
  %v1763 = vpop.f32.mrf.mxu0
  %v1764 = vpop.f32.mrf.mxu0
  %v1765 = vadd.f32 %v278, %v1764
  %v1766 = vpop.f32.mrf.mxu0
  %1767 = vmatprep.mubr.bf16.mxu0 0
  %1768 = vmatmul.mubr.bf16.gmra.mxu0 %v1087
  %v1769 = vpop.f32.mrf.mxu0
  %v1770 = vadd.f32 %v278, %v1769
  %v1771 = vpop.f32.mrf.mxu0
  %v1772 = vpop.f32.mrf.mxu0
  %v1773 = vadd.f32 %v278, %v1772
  %v1774 = vpop.f32.mrf.mxu0
  %1775 = vmatprep.mubr.bf16.mxu0 0
  %1776 = vmatmul.mubr.bf16.gmra.mxu0 %v1090
  %v1777 = vpop.f32.mrf.mxu0
  %v1778 = vadd.f32 %v278, %v1777
  %v1779 = vpop.f32.mrf.mxu0
  %v1780 = vpop.f32.mrf.mxu0
  %v1781 = vadd.f32 %v278, %v1780
  %v1782 = vpop.f32.mrf.mxu0
  %1783 = vmatprep.mubr.bf16.mxu0 0
  %1784 = vmatmul.mubr.bf16.gmra.mxu0 %v1093
  %v1785 = vpop.f32.mrf.mxu0
  %v1786 = vadd.f32 %v278, %v1785
  %v1787 = vpop.f32.mrf.mxu0
  %v1788 = vpop.f32.mrf.mxu0
  %v1789 = vadd.f32 %v278, %v1788
  %v1790 = vpop.f32.mrf.mxu0
  %1791 = vmatprep.mubr.bf16.mxu0 0
  %1792 = vmatmul.mubr.bf16.gmra.mxu0 %v1096
  %v1793 = vpop.f32.mrf.mxu0
  %v1794 = vadd.f32 %v278, %v1793
  %v1795 = vpop.f32.mrf.mxu0
  %v1796 = vpop.f32.mrf.mxu0
  %v1797 = vadd.f32 %v278, %v1796
  %v1798 = vpop.f32.mrf.mxu0
  %1799 = vmatprep.mubr.bf16.mxu0 0
  %1800 = vmatmul.mubr.bf16.gmra.mxu0 %v1099
  %v1801 = vpop.f32.mrf.mxu0
  %v1802 = vadd.f32 %v278, %v1801
  %v1803 = vpop.f32.mrf.mxu0
  %v1804 = vpop.f32.mrf.mxu0
  %v1805 = vadd.f32 %v278, %v1804
  %v1806 = vpop.f32.mrf.mxu0
  %1807 = vmatprep.mubr.bf16.mxu0 0
  %1808 = vmatmul.mubr.bf16.gmra.mxu0 %v1102
  %v1809 = vpop.f32.mrf.mxu0
  %v1810 = vadd.f32 %v278, %v1809
  %v1811 = vpop.f32.mrf.mxu0
  %v1812 = vpop.f32.mrf.mxu0
  %v1813 = vadd.f32 %v278, %v1812
  %v1814 = vpop.f32.mrf.mxu0
  %1815 = vmatprep.mubr.bf16.mxu0 0
  %1816 = vmatmul.mubr.bf16.gmra.mxu0 %v1105
  %v1817 = vpop.f32.mrf.mxu0
  %v1818 = vadd.f32 %v278, %v1817
  %v1819 = vpop.f32.mrf.mxu0
  %v1820 = vpop.f32.mrf.mxu0
  %v1821 = vadd.f32 %v278, %v1820
  %v1822 = vpop.f32.mrf.mxu0
  %1823 = vmatprep.mubr.bf16.mxu0 0
  %1824 = vmatmul.mubr.bf16.gmra.mxu0 %v1108
  %v1825 = vpop.f32.mrf.mxu0
  %v1826 = vadd.f32 %v278, %v1825
  %v1827 = vpop.f32.mrf.mxu0
  %v1828 = vpop.f32.mrf.mxu0
  %v1829 = vadd.f32 %v278, %v1828
  %v1830 = vpop.f32.mrf.mxu0
  %1831 = vmatprep.mubr.bf16.mxu0 0
  %1832 = vmatmul.mubr.bf16.gmra.mxu0 %v1111
  %v1833 = vpop.f32.mrf.mxu0
  %v1834 = vadd.f32 %v278, %v1833
  %v1835 = vpop.f32.mrf.mxu0
  %v1836 = vpop.f32.mrf.mxu0
  %v1837 = vadd.f32 %v278, %v1836
  %v1838 = vpop.f32.mrf.mxu0
  %1839 = vmatprep.mubr.bf16.mxu0 0
  %1840 = vmatmul.mubr.bf16.gmra.mxu0 %v1114
  %v1841 = vpop.f32.mrf.mxu0
  %v1842 = vadd.f32 %v278, %v1841
  %v1843 = vpop.f32.mrf.mxu0
  %v1844 = vpop.f32.mrf.mxu0
  %v1845 = vadd.f32 %v278, %v1844
  %v1846 = vpop.f32.mrf.mxu0
  %1847 = vmatprep.mubr.bf16.mxu0 0
  %1848 = vmatmul.mubr.bf16.gmra.mxu0 %v1117
  %v1849 = vpop.f32.mrf.mxu0
  %v1850 = vadd.f32 %v278, %v1849
  %v1851 = vpop.f32.mrf.mxu0
  %v1852 = vpop.f32.mrf.mxu0
  %v1853 = vadd.f32 %v278, %v1852
  %v1854 = vpop.f32.mrf.mxu0
  %1855 = vmatprep.mubr.bf16.mxu0 0
  %1856 = vmatmul.mubr.bf16.gmra.mxu0 %v1120
  %v1857 = vpop.f32.mrf.mxu0
  %v1858 = vadd.f32 %v278, %v1857
  %v1859 = vpop.f32.mrf.mxu0
  %v1860 = vpop.f32.mrf.mxu0
  %v1861 = vadd.f32 %v278, %v1860
  %v1862 = vpop.f32.mrf.mxu0
  %1863 = vmatprep.mubr.bf16.mxu0 0
  %1864 = vmatmul.mubr.bf16.gmra.mxu0 %v1123
  %v1865 = vpop.f32.mrf.mxu0
  %v1866 = vadd.f32 %v278, %v1865
  %v1867 = vpop.f32.mrf.mxu0
  %v1868 = vpop.f32.mrf.mxu0
  %v1869 = vadd.f32 %v278, %v1868
  %v1870 = vpop.f32.mrf.mxu0
  %1871 = vmatprep.mubr.bf16.mxu0 0
  %1872 = vmatmul.mubr.bf16.gmra.mxu0 %v1126
  %v1873 = vpop.f32.mrf.mxu0
  %v1874 = vadd.f32 %v278, %v1873
  %v1875 = vpop.f32.mrf.mxu0
  %v1876 = vpop.f32.mrf.mxu0
  %v1877 = vadd.f32 %v278, %v1876
  %v1878 = vpop.f32.mrf.mxu0
  %1879 = vmatprep.mubr.bf16.mxu0 0
  %1880 = vmatmul.mubr.bf16.gmra.mxu0 %v1129
  %v1881 = vpop.f32.mrf.mxu0
  %v1882 = vadd.f32 %v278, %v1881
  %v1883 = vpop.f32.mrf.mxu0
  %v1884 = vpop.f32.mrf.mxu0
  %v1885 = vadd.f32 %v278, %v1884
  %v1886 = vpop.f32.mrf.mxu0
  %1887 = vmatprep.mubr.bf16.mxu0 0
  %1888 = vmatmul.mubr.bf16.gmra.mxu0 %v1132
  %v1889 = vpop.f32.mrf.mxu0
  %v1890 = vadd.f32 %v278, %v1889
  %v1891 = vpop.f32.mrf.mxu0
  %v1892 = vpop.f32.mrf.mxu0
  %v1893 = vadd.f32 %v278, %v1892
  %v1894 = vpop.f32.mrf.mxu0
  %1895 = vmatprep.mubr.bf16.mxu0 0
  %1896 = vmatmul.mubr.bf16.gmra.mxu0 %v1135
  %v1897 = vpop.f32.mrf.mxu0
  %v1898 = vadd.f32 %v278, %v1897
  %v1899 = vpop.f32.mrf.mxu0
  %v1900 = vpop.f32.mrf.mxu0
  %v1901 = vadd.f32 %v278, %v1900
  %v1902 = vpop.f32.mrf.mxu0
  %1903 = vmatprep.mubr.bf16.mxu0 0
  %1904 = vmatmul.mubr.bf16.gmra.mxu0 %v1138
  %v1905 = vpop.f32.mrf.mxu0
  %v1906 = vadd.f32 %v278, %v1905
  %v1907 = vpop.f32.mrf.mxu0
  %v1908 = vpop.f32.mrf.mxu0
  %v1909 = vadd.f32 %v278, %v1908
  %v1910 = vpop.f32.mrf.mxu0
  %1911 = vmatprep.mubr.bf16.mxu0 0
  %1912 = vmatmul.mubr.bf16.gmra.mxu0 %v1141
  %v1913 = vpop.f32.mrf.mxu0
  %v1914 = vadd.f32 %v278, %v1913
  %v1915 = vpop.f32.mrf.mxu0
  %v1916 = vpop.f32.mrf.mxu0
  %v1917 = vadd.f32 %v278, %v1916
  %v1918 = vpop.f32.mrf.mxu0
  %1919 = vmatprep.mubr.bf16.mxu0 0
  %1920 = vmatmul.mubr.bf16.gmra.mxu0 %v1144
  %v1921 = vpop.f32.mrf.mxu0
  %v1922 = vadd.f32 %v278, %v1921
  %v1923 = vpop.f32.mrf.mxu0
  %v1924 = vpop.f32.mrf.mxu0
  %v1925 = vadd.f32 %v278, %v1924
  %v1926 = vpop.f32.mrf.mxu0
  %1927 = vmatprep.mubr.bf16.mxu0 0
  %1928 = vmatmul.mubr.bf16.gmra.mxu0 %v1147
  %v1929 = vpop.f32.mrf.mxu0
  %v1930 = vadd.f32 %v278, %v1929
  %v1931 = vpop.f32.mrf.mxu0
  %v1932 = vpop.f32.mrf.mxu0
  %v1933 = vadd.f32 %v278, %v1932
  %v1934 = vpop.f32.mrf.mxu0
  %1935 = vmatprep.mubr.bf16.mxu0 0
  %1936 = vmatmul.mubr.bf16.gmra.mxu0 %v1150
  %v1937 = vpop.f32.mrf.mxu0
  %v1938 = vadd.f32 %v278, %v1937
  %v1939 = vpop.f32.mrf.mxu0
  %v1940 = vpop.f32.mrf.mxu0
  %v1941 = vadd.f32 %v278, %v1940
  %v1942 = vpop.f32.mrf.mxu0
  %1943 = vmatprep.mubr.bf16.mxu0 0
  %1944 = vmatmul.mubr.bf16.gmra.mxu0 %v1153
  %v1945 = vpop.f32.mrf.mxu0
  %v1946 = vadd.f32 %v278, %v1945
  %v1947 = vpop.f32.mrf.mxu0
  %v1948 = vpop.f32.mrf.mxu0
  %v1949 = vadd.f32 %v278, %v1948
  %v1950 = vpop.f32.mrf.mxu0
  %1951 = vmatprep.mubr.bf16.mxu0 0
  %1952 = vmatmul.mubr.bf16.gmra.mxu0 %v1156
  %v1953 = vpop.f32.mrf.mxu0
  %v1954 = vadd.f32 %v278, %v1953
  %v1955 = vpop.f32.mrf.mxu0
  %v1956 = vpop.f32.mrf.mxu0
  %v1957 = vadd.f32 %v278, %v1956
  %v1958 = vpop.f32.mrf.mxu0
  %1959 = vmatprep.mubr.bf16.mxu0 0
  %1960 = vmatmul.mubr.bf16.gmra.mxu0 %v1159
  %v1961 = vpop.f32.mrf.mxu0
  %v1962 = vadd.f32 %v278, %v1961
  %v1963 = vpop.f32.mrf.mxu0
  %v1964 = vpop.f32.mrf.mxu0
  %v1965 = vadd.f32 %v278, %v1964
  %v1966 = vpop.f32.mrf.mxu0
  %1967 = vmatprep.mubr.bf16.mxu0 0
  %1968 = vmatmul.mubr.bf16.gmra.mxu0 %v1162
  %v1969 = vpop.f32.mrf.mxu0
  %v1970 = vadd.f32 %v278, %v1969
  %v1971 = vpop.f32.mrf.mxu0
  %v1972 = vpop.f32.mrf.mxu0
  %v1973 = vadd.f32 %v278, %v1972
  %v1974 = vpop.f32.mrf.mxu0
  %1975 = vmatprep.mubr.bf16.mxu0 0
  %1976 = vmatmul.mubr.bf16.gmra.mxu0 %v1165
  %v1977 = vpop.f32.mrf.mxu0
  %v1978 = vadd.f32 %v278, %v1977
  %v1979 = vpop.f32.mrf.mxu0
  %v1980 = vpop.f32.mrf.mxu0
  %v1981 = vadd.f32 %v278, %v1980
  %v1982 = vpop.f32.mrf.mxu0
  %1983 = vmatprep.mubr.bf16.mxu0 0
  %1984 = vmatmul.mubr.bf16.gmra.mxu0 %v1168
  %v1985 = vpop.f32.mrf.mxu0
  %v1986 = vadd.f32 %v278, %v1985
  %v1987 = vpop.f32.mrf.mxu0
  %v1988 = vpop.f32.mrf.mxu0
  %v1989 = vadd.f32 %v278, %v1988
  %v1990 = vpop.f32.mrf.mxu0
  %1991 = vmatprep.mubr.bf16.mxu0 0
  %1992 = vmatmul.mubr.bf16.gmra.mxu0 %v1171
  %v1993 = vpop.f32.mrf.mxu0
  %v1994 = vadd.f32 %v278, %v1993
  %v1995 = vpop.f32.mrf.mxu0
  %v1996 = vpop.f32.mrf.mxu0
  %v1997 = vadd.f32 %v278, %v1996
  %v1998 = vpop.f32.mrf.mxu0
  %1999 = vmatprep.mubr.bf16.mxu0 0
  %2000 = vmatmul.mubr.bf16.gmra.mxu0 %v1174
  %v2001 = vpop.f32.mrf.mxu0
  %v2002 = vadd.f32 %v278, %v2001
  %v2003 = vpop.f32.mrf.mxu0
  %v2004 = vpop.f32.mrf.mxu0
  %v2005 = vadd.f32 %v278, %v2004
  %v2006 = vpop.f32.mrf.mxu0
  %2007 = vmatprep.mubr.bf16.mxu0 0
  %2008 = vmatmul.mubr.bf16.gmra.mxu0 %v1177
  %v2009 = vpop.f32.mrf.mxu0
  %v2010 = vadd.f32 %v278, %v2009
  %v2011 = vpop.f32.mrf.mxu0
  %v2012 = vpop.f32.mrf.mxu0
  %v2013 = vadd.f32 %v278, %v2012
  %v2014 = vpop.f32.mrf.mxu0
  %2015 = vmatprep.mubr.bf16.mxu0 0
  %2016 = vmatmul.mubr.bf16.gmra.mxu0 %v1180
  %v2017 = vpop.f32.mrf.mxu0
  %v2018 = vadd.f32 %v278, %v2017
  %v2019 = vpop.f32.mrf.mxu0
  %v2020 = vpop.f32.mrf.mxu0
  %v2021 = vadd.f32 %v278, %v2020
  %v2022 = vpop.f32.mrf.mxu0
  %2023 = vmatprep.mubr.bf16.mxu0 0
  %2024 = vmatmul.mubr.bf16.gmra.mxu0 %v1183
  %v2025 = vpop.f32.mrf.mxu0
  %v2026 = vadd.f32 %v278, %v2025
  %v2027 = vpop.f32.mrf.mxu0
  %v2028 = vpop.f32.mrf.mxu0
  %v2029 = vadd.f32 %v278, %v2028
  %v2030 = vpop.f32.mrf.mxu0
  %2031 = vmatprep.mubr.bf16.mxu0 0
  %2032 = vmatmul.mubr.bf16.gmra.mxu0 %v1186
  %v2033 = vpop.f32.mrf.mxu0
  %v2034 = vadd.f32 %v278, %v2033
  %v2035 = vpop.f32.mrf.mxu0
  %v2036 = vpop.f32.mrf.mxu0
  %v2037 = vadd.f32 %v278, %v2036
  %v2038 = vpop.f32.mrf.mxu0
  %2039 = vmatprep.mubr.bf16.mxu0 0
  %2040 = vmatmul.mubr.bf16.gmra.mxu0 %v1189
  %v2041 = vpop.f32.mrf.mxu0
  %v2042 = vadd.f32 %v278, %v2041
  %v2043 = vpop.f32.mrf.mxu0
  %v2044 = vpop.f32.mrf.mxu0
  %v2045 = vadd.f32 %v278, %v2044
  %v2046 = vpop.f32.mrf.mxu0
  %2047 = vmatprep.mubr.bf16.mxu0 0
  %2048 = vmatmul.mubr.bf16.gmra.mxu0 %v1192
  %v2049 = vpop.f32.mrf.mxu0
  %v2050 = vadd.f32 %v278, %v2049
  %v2051 = vpop.f32.mrf.mxu0
  %v2052 = vpop.f32.mrf.mxu0
  %v2053 = vadd.f32 %v278, %v2052
  %v2054 = vpop.f32.mrf.mxu0
  %2055 = vmatprep.mubr.bf16.mxu0 0
  %2056 = vmatmul.mubr.bf16.gmra.mxu0 %v1195
  %v2057 = vpop.f32.mrf.mxu0
  %v2058 = vadd.f32 %v278, %v2057
  %v2059 = vpop.f32.mrf.mxu0
  %v2060 = vpop.f32.mrf.mxu0
  %v2061 = vadd.f32 %v278, %v2060
  %v2062 = vpop.f32.mrf.mxu0
  %2063 = vmatprep.mubr.bf16.mxu0 0
  %2064 = vmatmul.mubr.bf16.gmra.mxu0 %v1198
  %v2065 = vpop.f32.mrf.mxu0
  %v2066 = vadd.f32 %v278, %v2065
  %v2067 = vpop.f32.mrf.mxu0
  %v2068 = vpop.f32.mrf.mxu0
  %v2069 = vadd.f32 %v278, %v2068
  %v2070 = vpop.f32.mrf.mxu0
  %2071 = vmatprep.mubr.bf16.mxu0 0
  %2072 = vmatmul.mubr.bf16.gmra.mxu0 %v1201
  %v2073 = vpop.f32.mrf.mxu0
  %v2074 = vadd.f32 %v278, %v2073
  %v2075 = vpop.f32.mrf.mxu0
  %v2076 = vpop.f32.mrf.mxu0
  %v2077 = vadd.f32 %v278, %v2076
  %v2078 = vpop.f32.mrf.mxu0
  %2079 = vmatprep.mubr.bf16.mxu0 0
  %2080 = vmatmul.mubr.bf16.gmra.mxu0 %v1204
  %v2081 = vpop.f32.mrf.mxu0
  %v2082 = vadd.f32 %v278, %v2081
  %v2083 = vpop.f32.mrf.mxu0
  %v2084 = vpop.f32.mrf.mxu0
  %v2085 = vadd.f32 %v278, %v2084
  %v2086 = vpop.f32.mrf.mxu0
  %2087 = vmatprep.mubr.bf16.mxu0 0
  %2088 = vmatmul.mubr.bf16.gmra.mxu0 %v1207
  %v2089 = vpop.f32.mrf.mxu0
  %v2090 = vadd.f32 %v278, %v2089
  %v2091 = vpop.f32.mrf.mxu0
  %v2092 = vpop.f32.mrf.mxu0
  %v2093 = vadd.f32 %v278, %v2092
  %v2094 = vpop.f32.mrf.mxu0
  %2095 = vmatprep.mubr.bf16.mxu0 0
  %2096 = vmatmul.mubr.bf16.gmra.mxu0 %v1210
  %v2097 = vpop.f32.mrf.mxu0
  %v2098 = vadd.f32 %v278, %v2097
  %v2099 = vpop.f32.mrf.mxu0
  %v2100 = vpop.f32.mrf.mxu0
  %v2101 = vadd.f32 %v278, %v2100
  %v2102 = vpop.f32.mrf.mxu0
  %2103 = vmatprep.mubr.bf16.mxu0 0
  %2104 = vmatmul.mubr.bf16.gmra.mxu0 %v1213
  %v2105 = vpop.f32.mrf.mxu0
  %v2106 = vadd.f32 %v278, %v2105
  %v2107 = vpop.f32.mrf.mxu0
  %v2108 = vpop.f32.mrf.mxu0
  %v2109 = vadd.f32 %v278, %v2108
  %v2110 = vpop.f32.mrf.mxu0
  %2111 = vmatprep.mubr.bf16.mxu0 0
  %2112 = vmatmul.mubr.bf16.gmra.mxu0 %v1216
  %v2113 = vpop.f32.mrf.mxu0
  %v2114 = vadd.f32 %v278, %v2113
  %v2115 = vpop.f32.mrf.mxu0
  %v2116 = vpop.f32.mrf.mxu0
  %v2117 = vadd.f32 %v278, %v2116
  %v2118 = vpop.f32.mrf.mxu0
  %2119 = vmatprep.mubr.bf16.mxu0 0
  %2120 = vmatmul.mubr.bf16.gmra.mxu0 %v1219
  %v2121 = vpop.f32.mrf.mxu0
  %v2122 = vadd.f32 %v278, %v2121
  %v2123 = vpop.f32.mrf.mxu0
  %v2124 = vpop.f32.mrf.mxu0
  %v2125 = vadd.f32 %v278, %v2124
  %v2126 = vpop.f32.mrf.mxu0
  %2127 = vmatprep.mubr.bf16.mxu0 0
  %2128 = vmatmul.mubr.bf16.gmra.mxu0 %v1222
  %v2129 = vpop.f32.mrf.mxu0
  %v2130 = vadd.f32 %v278, %v2129
  %v2131 = vpop.f32.mrf.mxu0
  %v2132 = vpop.f32.mrf.mxu0
  %v2133 = vadd.f32 %v278, %v2132
  %v2134 = vpop.f32.mrf.mxu0
  %2135 = vmatprep.mubr.bf16.mxu0 0
  %2136 = vmatmul.mubr.bf16.gmra.mxu0 %v1225
  %v2137 = vpop.f32.mrf.mxu0
  %v2138 = vadd.f32 %v278, %v2137
  %v2139 = vpop.f32.mrf.mxu0
  %v2140 = vpop.f32.mrf.mxu0
  %v2141 = vadd.f32 %v278, %v2140
  %v2142 = vpop.f32.mrf.mxu0
  %2143 = vmatprep.mubr.bf16.mxu0 0
  %2144 = vmatmul.mubr.bf16.gmra.mxu0 %v1228
  %v2145 = vpop.f32.mrf.mxu0
  %v2146 = vadd.f32 %v278, %v2145
  %v2147 = vpop.f32.mrf.mxu0
  %v2148 = vpop.f32.mrf.mxu0
  %v2149 = vadd.f32 %v278, %v2148
  %v2150 = vpop.f32.mrf.mxu0
  %2151 = vmatprep.mubr.bf16.mxu0 0
  %2152 = vmatmul.mubr.bf16.gmra.mxu0 %v1231
  %v2153 = vpop.f32.mrf.mxu0
  %v2154 = vadd.f32 %v278, %v2153
  %v2155 = vpop.f32.mrf.mxu0
  %v2156 = vpop.f32.mrf.mxu0
  %v2157 = vadd.f32 %v278, %v2156
  %v2158 = vpop.f32.mrf.mxu0
  %2159 = vmatprep.mubr.bf16.mxu0 0
  %2160 = vmatmul.mubr.bf16.gmra.mxu0 %v1234
  %v2161 = vpop.f32.mrf.mxu0
  %v2162 = vadd.f32 %v278, %v2161
  %v2163 = vpop.f32.mrf.mxu0
  %v2164 = vpop.f32.mrf.mxu0
  %v2165 = vadd.f32 %v278, %v2164
  %v2166 = vpop.f32.mrf.mxu0
  %2167 = vmatprep.mubr.bf16.mxu0 0
  %2168 = vmatmul.mubr.bf16.gmra.mxu0 %v1237
  %v2169 = vpop.f32.mrf.mxu0
  %v2170 = vadd.f32 %v278, %v2169
  %v2171 = vpop.f32.mrf.mxu0
  %v2172 = vpop.f32.mrf.mxu0
  %v2173 = vadd.f32 %v278, %v2172
  %v2174 = vpop.f32.mrf.mxu0
  %2175 = vmatprep.mubr.bf16.mxu0 0
  %2176 = vmatmul.mubr.bf16.gmra.mxu0 %v1240
  %v2177 = vpop.f32.mrf.mxu0
  %v2178 = vadd.f32 %v278, %v2177
  %v2179 = vpop.f32.mrf.mxu0
  %v2180 = vpop.f32.mrf.mxu0
  %v2181 = vadd.f32 %v278, %v2180
  %v2182 = vpop.f32.mrf.mxu0
  %2183 = vmatprep.mubr.bf16.mxu0 0
  %2184 = vmatmul.mubr.bf16.gmra.mxu0 %v1243
  %v2185 = vpop.f32.mrf.mxu0
  %v2186 = vadd.f32 %v278, %v2185
  %v2187 = vpop.f32.mrf.mxu0
  %v2188 = vpop.f32.mrf.mxu0
  %v2189 = vadd.f32 %v278, %v2188
  %v2190 = vpop.f32.mrf.mxu0
  %2191 = vmatprep.mubr.bf16.mxu0 0
  %2192 = vmatmul.mubr.bf16.gmra.mxu0 %v1246
  %v2193 = vpop.f32.mrf.mxu0
  %v2194 = vadd.f32 %v278, %v2193
  %v2195 = vpop.f32.mrf.mxu0
  %v2196 = vpop.f32.mrf.mxu0
  %v2197 = vadd.f32 %v278, %v2196
  %v2198 = vpop.f32.mrf.mxu0
  %2199 = vmatprep.mubr.bf16.mxu0 0
  %2200 = vmatmul.mubr.bf16.gmra.mxu0 %v1249
  %v2201 = vpop.f32.mrf.mxu0
  %v2202 = vadd.f32 %v278, %v2201
  %v2203 = vpop.f32.mrf.mxu0
  %v2204 = vpop.f32.mrf.mxu0
  %v2205 = vadd.f32 %v278, %v2204
  %v2206 = vpop.f32.mrf.mxu0
  %2207 = vmatprep.mubr.bf16.mxu0 0
  %2208 = vmatmul.mubr.bf16.gmra.mxu0 %v1252
  %v2209 = vpop.f32.mrf.mxu0
  %v2210 = vadd.f32 %v278, %v2209
  %v2211 = vpop.f32.mrf.mxu0
  %v2212 = vpop.f32.mrf.mxu0
  %v2213 = vadd.f32 %v278, %v2212
  %v2214 = vpop.f32.mrf.mxu0
  %2215 = vmatprep.mubr.bf16.mxu0 0
  %2216 = vmatmul.mubr.bf16.gmra.mxu0 %v1255
  %v2217 = vpop.f32.mrf.mxu0
  %v2218 = vadd.f32 %v278, %v2217
  %v2219 = vpop.f32.mrf.mxu0
  %v2220 = vpop.f32.mrf.mxu0
  %v2221 = vadd.f32 %v278, %v2220
  %v2222 = vpop.f32.mrf.mxu0
  %2223 = vmatprep.mubr.bf16.mxu0 0
  %2224 = vmatmul.mubr.bf16.gmra.mxu0 %v1258
  %v2225 = vpop.f32.mrf.mxu0
  %v2226 = vadd.f32 %v278, %v2225
  %v2227 = vpop.f32.mrf.mxu0
  %v2228 = vpop.f32.mrf.mxu0
  %v2229 = vadd.f32 %v278, %v2228
  %v2230 = vpop.f32.mrf.mxu0
  %2231 = vmatprep.mubr.bf16.mxu0 0
  %2232 = vmatmul.mubr.bf16.gmra.mxu0 %v1261
  %v2233 = vpop.f32.mrf.mxu0
  %v2234 = vadd.f32 %v278, %v2233
  %v2235 = vpop.f32.mrf.mxu0
  %v2236 = vpop.f32.mrf.mxu0
  %v2237 = vadd.f32 %v278, %v2236
  %v2238 = vpop.f32.mrf.mxu0
  %2239 = vmatprep.mubr.bf16.mxu0 0
  %2240 = vmatmul.mubr.bf16.gmra.mxu0 %v1264
  %v2241 = vpop.f32.mrf.mxu0
  %v2242 = vadd.f32 %v278, %v2241
  %v2243 = vpop.f32.mrf.mxu0
  %v2244 = vpop.f32.mrf.mxu0
  %v2245 = vadd.f32 %v278, %v2244
  %v2246 = vpop.f32.mrf.mxu0
  %2247 = vmatprep.mubr.bf16.mxu0 0
  %2248 = vmatmul.mubr.bf16.gmra.mxu0 %v1267
  %v2249 = vpop.f32.mrf.mxu0
  %v2250 = vadd.f32 %v278, %v2249
  %v2251 = vpop.f32.mrf.mxu0
  %v2252 = vpop.f32.mrf.mxu0
  %v2253 = vadd.f32 %v278, %v2252
  %v2254 = vpop.f32.mrf.mxu0
  %2255 = vmatprep.mubr.bf16.mxu0 0
  %2256 = vmatmul.mubr.bf16.gmra.mxu0 %v1270
  %v2257 = vpop.f32.mrf.mxu0
  %v2258 = vadd.f32 %v278, %v2257
  %v2259 = vpop.f32.mrf.mxu0
  %v2260 = vpop.f32.mrf.mxu0
  %v2261 = vadd.f32 %v278, %v2260
  %v2262 = vpop.f32.mrf.mxu0
  %2263 = vmatprep.mubr.bf16.mxu0 0
  %2264 = vmatmul.mubr.bf16.gmra.mxu0 %v1273
  %v2265 = vpop.f32.mrf.mxu0
  %v2266 = vadd.f32 %v278, %v2265
  %v2267 = vpop.f32.mrf.mxu0
  %v2268 = vpop.f32.mrf.mxu0
  %v2269 = vadd.f32 %v278, %v2268
  %v2270 = vpop.f32.mrf.mxu0
  %2271 = vmatprep.mubr.bf16.mxu0 0
  %2272 = vmatmul.mubr.bf16.gmra.mxu0 %v1276
  %v2273 = vpop.f32.mrf.mxu0
  %v2274 = vadd.f32 %v278, %v2273
  %v2275 = vpop.f32.mrf.mxu0
  %v2276 = vpop.f32.mrf.mxu0
  %v2277 = vadd.f32 %v278, %v2276
  %v2278 = vpop.f32.mrf.mxu0
  %2279 = vmatprep.mubr.bf16.mxu0 0
  %2280 = vmatmul.mubr.bf16.gmra.mxu0 %v1279
  %v2281 = vpop.f32.mrf.mxu0
  %v2282 = vadd.f32 %v278, %v2281
  %v2283 = vpop.f32.mrf.mxu0
  %v2284 = vpop.f32.mrf.mxu0
  %v2285 = vadd.f32 %v278, %v2284
  %v2286 = vpop.f32.mrf.mxu0
  %2287 = vmatprep.mubr.bf16.mxu0 0
  %2288 = vmatmul.mubr.bf16.gmra.mxu0 %v1282
  %v2289 = vpop.f32.mrf.mxu0
  %v2290 = vadd.f32 %v278, %v2289
  %v2291 = vpop.f32.mrf.mxu0
  %v2292 = vpop.f32.mrf.mxu0
  %v2293 = vadd.f32 %v278, %v2292
  %v2294 = vpop.f32.mrf.mxu0
  %2295 = vmatprep.mubr.bf16.mxu0 0
  %2296 = vmatmul.mubr.bf16.gmra.mxu0 %v1285
  %v2297 = vpop.f32.mrf.mxu0
  %v2298 = vadd.f32 %v278, %v2297
  %v2299 = vpop.f32.mrf.mxu0
  %v2300 = vpop.f32.mrf.mxu0
  %v2301 = vadd.f32 %v278, %v2300
  %v2302 = vpop.f32.mrf.mxu0
  %2303 = vmatprep.mubr.bf16.mxu0 0
  %2304 = vmatmul.mubr.bf16.gmra.mxu0 %v1288
  %v2305 = vpop.f32.mrf.mxu0
  %v2306 = vadd.f32 %v278, %v2305
  %v2307 = vpop.f32.mrf.mxu0
  %v2308 = vpop.f32.mrf.mxu0
  %v2309 = vadd.f32 %v278, %v2308
  %v2310 = vpop.f32.mrf.mxu0
  %2311 = vmatprep.mubr.bf16.mxu0 0
  %2312 = vmatmul.mubr.bf16.gmra.mxu0 %v1291
  %v2313 = vpop.f32.mrf.mxu0
  %v2314 = vadd.f32 %v278, %v2313
  %v2315 = vpop.f32.mrf.mxu0
  %v2316 = vpop.f32.mrf.mxu0
  %v2317 = vadd.f32 %v278, %v2316
  %v2318 = vpop.f32.mrf.mxu0
  %2319 = vmatprep.mubr.bf16.mxu0 0
  %2320 = vmatmul.mubr.bf16.gmra.mxu0 %v1294
  %v2321 = vpop.f32.mrf.mxu0
  %v2322 = vadd.f32 %v278, %v2321
  %v2323 = vpop.f32.mrf.mxu0
  %v2324 = vpop.f32.mrf.mxu0
  %v2325 = vadd.f32 %v278, %v2324
  %v2326 = vpop.f32.mrf.mxu0
  %2327 = vmatprep.mubr.bf16.mxu0 0
  %2328 = vmatmul.mubr.bf16.gmra.mxu0 %v1297
  %v2329 = vpop.f32.mrf.mxu0
  %v2330 = vadd.f32 %v278, %v2329
  %v2331 = vpop.f32.mrf.mxu0
  %v2332 = vpop.f32.mrf.mxu0
  %v2333 = vadd.f32 %v278, %v2332
  %v2334 = vpop.f32.mrf.mxu0
  %2335 = vmatprep.mubr.bf16.mxu0 0
  %2336 = vmatmul.mubr.bf16.gmra.mxu0 %v1300
  %v2337 = vpop.f32.mrf.mxu0
  %v2338 = vadd.f32 %v278, %v2337
  %v2339 = vpop.f32.mrf.mxu0
  %v2340 = vpop.f32.mrf.mxu0
  %v2341 = vadd.f32 %v278, %v2340
  %v2342 = vpop.f32.mrf.mxu0
  %2343 = vmatprep.mubr.bf16.mxu0 0
  %2344 = vmatmul.mubr.bf16.gmra.mxu0 %v1303
  %v2345 = vpop.f32.mrf.mxu0
  %v2346 = vadd.f32 %v278, %v2345
  %v2347 = vpop.f32.mrf.mxu0
  %v2348 = vpop.f32.mrf.mxu0
  %v2349 = vadd.f32 %v278, %v2348
  %v2350 = vpop.f32.mrf.mxu0
  %2351 = vmatprep.mubr.bf16.mxu0 0
  %2352 = vmatmul.mubr.bf16.gmra.mxu0 %v1306
  %v2353 = vpop.f32.mrf.mxu0
  %v2354 = vadd.f32 %v278, %v2353
  %v2355 = vpop.f32.mrf.mxu0
  %v2356 = vpop.f32.mrf.mxu0
  %v2357 = vadd.f32 %v278, %v2356
  %v2358 = vpop.f32.mrf.mxu0
  %2359 = vmatprep.mubr.bf16.mxu0 0
  %2360 = vmatmul.mubr.bf16.gmra.mxu0 %v1309
  %v2361 = vpop.f32.mrf.mxu0
  %v2362 = vadd.f32 %v278, %v2361
  %v2363 = vpop.f32.mrf.mxu0
  %v2364 = vpop.f32.mrf.mxu0
  %v2365 = vadd.f32 %v278, %v2364
  %v2366 = vpop.f32.mrf.mxu0
  %2367 = vdwg.mxu0
  %v2368 = vmax.f32 %v1346, 0.0
  %v2369 = vmax.f32 %v1349, 0.0
  %v2370 = vmax.f32 %v1354, 0.0
  %v2371 = vmax.f32 %v1357, 0.0
  %v2372 = vmax.f32 %v1362, 0.0
  %v2373 = vmax.f32 %v1365, 0.0
  %v2374 = vmax.f32 %v1370, 0.0
  %v2375 = vmax.f32 %v1373, 0.0
  %v2376 = vmax.f32 %v1378, 0.0
  %v2377 = vmax.f32 %v1381, 0.0
  %v2378 = vmax.f32 %v1386, 0.0
  %v2379 = vmax.f32 %v1389, 0.0
  %v2380 = vmax.f32 %v1394, 0.0
  %v2381 = vmax.f32 %v1397, 0.0
  %v2382 = vmax.f32 %v1402, 0.0
  %v2383 = vmax.f32 %v1405, 0.0
  %v2384 = vmax.f32 %v1410, 0.0
  %v2385 = vmax.f32 %v1413, 0.0
  %v2386 = vmax.f32 %v1418, 0.0
  %v2387 = vmax.f32 %v1421, 0.0
  %v2388 = vmax.f32 %v1426, 0.0
  %v2389 = vmax.f32 %v1429, 0.0
  %v2390 = vmax.f32 %v1434, 0.0
  %v2391 = vmax.f32 %v1437, 0.0
  %v2392 = vmax.f32 %v1442, 0.0
  %v2393 = vmax.f32 %v1445, 0.0
  %v2394 = vmax.f32 %v1450, 0.0
  %v2395 = vmax.f32 %v1453, 0.0
  %v2396 = vmax.f32 %v1458, 0.0
  %v2397 = vmax.f32 %v1461, 0.0
  %v2398 = vmax.f32 %v1466, 0.0
  %v2399 = vmax.f32 %v1469, 0.0
  %v2400 = vmax.f32 %v1474, 0.0
  %v2401 = vmax.f32 %v1477, 0.0
  %v2402 = vmax.f32 %v1482, 0.0
  %v2403 = vmax.f32 %v1485, 0.0
  %v2404 = vmax.f32 %v1490, 0.0
  %v2405 = vmax.f32 %v1493, 0.0
  %v2406 = vmax.f32 %v1498, 0.0
  %v2407 = vmax.f32 %v1501, 0.0
  %v2408 = vmax.f32 %v1506, 0.0
  %v2409 = vmax.f32 %v1509, 0.0
  %v2410 = vmax.f32 %v1514, 0.0
  %v2411 = vmax.f32 %v1517, 0.0
  %v2412 = vmax.f32 %v1522, 0.0
  %v2413 = vmax.f32 %v1525, 0.0
  %v2414 = vmax.f32 %v1530, 0.0
  %v2415 = vmax.f32 %v1533, 0.0
  %v2416 = vmax.f32 %v1538, 0.0
  %v2417 = vmax.f32 %v1541, 0.0
  %v2418 = vmax.f32 %v1546, 0.0
  %v2419 = vmax.f32 %v1549, 0.0
  %v2420 = vmax.f32 %v1554, 0.0
  %v2421 = vmax.f32 %v1557, 0.0
  %v2422 = vmax.f32 %v1562, 0.0
  %v2423 = vmax.f32 %v1565, 0.0
  %v2424 = vmax.f32 %v1570, 0.0
  %v2425 = vmax.f32 %v1573, 0.0
  %v2426 = vmax.f32 %v1578, 0.0
  %v2427 = vmax.f32 %v1581, 0.0
  %v2428 = vmax.f32 %v1586, 0.0
  %v2429 = vmax.f32 %v1589, 0.0
  %v2430 = vmax.f32 %v1594, 0.0
  %v2431 = vmax.f32 %v1597, 0.0
  %v2432 = vmax.f32 %v1602, 0.0
  %v2433 = vmax.f32 %v1605, 0.0
  %v2434 = vmax.f32 %v1610, 0.0
  %v2435 = vmax.f32 %v1613, 0.0
  %v2436 = vmax.f32 %v1618, 0.0
  %v2437 = vmax.f32 %v1621, 0.0
  %v2438 = vmax.f32 %v1626, 0.0
  %v2439 = vmax.f32 %v1629, 0.0
  %v2440 = vmax.f32 %v1634, 0.0
  %v2441 = vmax.f32 %v1637, 0.0
  %v2442 = vmax.f32 %v1642, 0.0
  %v2443 = vmax.f32 %v1645, 0.0
  %v2444 = vmax.f32 %v1650, 0.0
  %v2445 = vmax.f32 %v1653, 0.0
  %v2446 = vmax.f32 %v1658, 0.0
  %v2447 = vmax.f32 %v1661, 0.0
  %v2448 = vmax.f32 %v1666, 0.0
  %v2449 = vmax.f32 %v1669, 0.0
  %v2450 = vmax.f32 %v1674, 0.0
  %v2451 = vmax.f32 %v1677, 0.0
  %v2452 = vmax.f32 %v1682, 0.0
  %v2453 = vmax.f32 %v1685, 0.0
  %v2454 = vmax.f32 %v1690, 0.0
  %v2455 = vmax.f32 %v1693, 0.0
  %v2456 = vmax.f32 %v1698, 0.0
  %v2457 = vmax.f32 %v1701, 0.0
  %v2458 = vmax.f32 %v1706, 0.0
  %v2459 = vmax.f32 %v1709, 0.0
  %v2460 = vmax.f32 %v1714, 0.0
  %v2461 = vmax.f32 %v1717, 0.0
  %v2462 = vmax.f32 %v1722, 0.0
  %v2463 = vmax.f32 %v1725, 0.0
  %v2464 = vmax.f32 %v1730, 0.0
  %v2465 = vmax.f32 %v1733, 0.0
  %v2466 = vmax.f32 %v1738, 0.0
  %v2467 = vmax.f32 %v1741, 0.0
  %v2468 = vmax.f32 %v1746, 0.0
  %v2469 = vmax.f32 %v1749, 0.0
  %v2470 = vmax.f32 %v1754, 0.0
  %v2471 = vmax.f32 %v1757, 0.0
  %v2472 = vmax.f32 %v1762, 0.0
  %v2473 = vmax.f32 %v1765, 0.0
  %v2474 = vmax.f32 %v1770, 0.0
  %v2475 = vmax.f32 %v1773, 0.0
  %v2476 = vmax.f32 %v1778, 0.0
  %v2477 = vmax.f32 %v1781, 0.0
  %v2478 = vmax.f32 %v1786, 0.0
  %v2479 = vmax.f32 %v1789, 0.0
  %v2480 = vmax.f32 %v1794, 0.0
  %v2481 = vmax.f32 %v1797, 0.0
  %v2482 = vmax.f32 %v1802, 0.0
  %v2483 = vmax.f32 %v1805, 0.0
  %v2484 = vmax.f32 %v1810, 0.0
  %v2485 = vmax.f32 %v1813, 0.0
  %v2486 = vmax.f32 %v1818, 0.0
  %v2487 = vmax.f32 %v1821, 0.0
  %v2488 = vmax.f32 %v1826, 0.0
  %v2489 = vmax.f32 %v1829, 0.0
  %v2490 = vmax.f32 %v1834, 0.0
  %v2491 = vmax.f32 %v1837, 0.0
  %v2492 = vmax.f32 %v1842, 0.0
  %v2493 = vmax.f32 %v1845, 0.0
  %v2494 = vmax.f32 %v1850, 0.0
  %v2495 = vmax.f32 %v1853, 0.0
  %v2496 = vmax.f32 %v1858, 0.0
  %v2497 = vmax.f32 %v1861, 0.0
  %v2498 = vmax.f32 %v1866, 0.0
  %v2499 = vmax.f32 %v1869, 0.0
  %v2500 = vmax.f32 %v1874, 0.0
  %v2501 = vmax.f32 %v1877, 0.0
  %v2502 = vmax.f32 %v1882, 0.0
  %v2503 = vmax.f32 %v1885, 0.0
  %v2504 = vmax.f32 %v1890, 0.0
  %v2505 = vmax.f32 %v1893, 0.0
  %v2506 = vmax.f32 %v1898, 0.0
  %v2507 = vmax.f32 %v1901, 0.0
  %v2508 = vmax.f32 %v1906, 0.0
  %v2509 = vmax.f32 %v1909, 0.0
  %v2510 = vmax.f32 %v1914, 0.0
  %v2511 = vmax.f32 %v1917, 0.0
  %v2512 = vmax.f32 %v1922, 0.0
  %v2513 = vmax.f32 %v1925, 0.0
  %v2514 = vmax.f32 %v1930, 0.0
  %v2515 = vmax.f32 %v1933, 0.0
  %v2516 = vmax.f32 %v1938, 0.0
  %v2517 = vmax.f32 %v1941, 0.0
  %v2518 = vmax.f32 %v1946, 0.0
  %v2519 = vmax.f32 %v1949, 0.0
  %v2520 = vmax.f32 %v1954, 0.0
  %v2521 = vmax.f32 %v1957, 0.0
  %v2522 = vmax.f32 %v1962, 0.0
  %v2523 = vmax.f32 %v1965, 0.0
  %v2524 = vmax.f32 %v1970, 0.0
  %v2525 = vmax.f32 %v1973, 0.0
  %v2526 = vmax.f32 %v1978, 0.0
  %v2527 = vmax.f32 %v1981, 0.0
  %v2528 = vmax.f32 %v1986, 0.0
  %v2529 = vmax.f32 %v1989, 0.0
  %v2530 = vmax.f32 %v1994, 0.0
  %v2531 = vmax.f32 %v1997, 0.0
  %v2532 = vmax.f32 %v2002, 0.0
  %v2533 = vmax.f32 %v2005, 0.0
  %v2534 = vmax.f32 %v2010, 0.0
  %v2535 = vmax.f32 %v2013, 0.0
  %v2536 = vmax.f32 %v2018, 0.0
  %v2537 = vmax.f32 %v2021, 0.0
  %v2538 = vmax.f32 %v2026, 0.0
  %v2539 = vmax.f32 %v2029, 0.0
  %v2540 = vmax.f32 %v2034, 0.0
  %v2541 = vmax.f32 %v2037, 0.0
  %v2542 = vmax.f32 %v2042, 0.0
  %v2543 = vmax.f32 %v2045, 0.0
  %v2544 = vmax.f32 %v2050, 0.0
  %v2545 = vmax.f32 %v2053, 0.0
  %v2546 = vmax.f32 %v2058, 0.0
  %v2547 = vmax.f32 %v2061, 0.0
  %v2548 = vmax.f32 %v2066, 0.0
  %v2549 = vmax.f32 %v2069, 0.0
  %v2550 = vmax.f32 %v2074, 0.0
  %v2551 = vmax.f32 %v2077, 0.0
  %v2552 = vmax.f32 %v2082, 0.0
  %v2553 = vmax.f32 %v2085, 0.0
  %v2554 = vmax.f32 %v2090, 0.0
  %v2555 = vmax.f32 %v2093, 0.0
  %v2556 = vmax.f32 %v2098, 0.0
  %v2557 = vmax.f32 %v2101, 0.0
  %v2558 = vmax.f32 %v2106, 0.0
  %v2559 = vmax.f32 %v2109, 0.0
  %v2560 = vmax.f32 %v2114, 0.0
  %v2561 = vmax.f32 %v2117, 0.0
  %v2562 = vmax.f32 %v2122, 0.0
  %v2563 = vmax.f32 %v2125, 0.0
  %v2564 = vmax.f32 %v2130, 0.0
  %v2565 = vmax.f32 %v2133, 0.0
  %v2566 = vmax.f32 %v2138, 0.0
  %v2567 = vmax.f32 %v2141, 0.0
  %v2568 = vmax.f32 %v2146, 0.0
  %v2569 = vmax.f32 %v2149, 0.0
  %v2570 = vmax.f32 %v2154, 0.0
  %v2571 = vmax.f32 %v2157, 0.0
  %v2572 = vmax.f32 %v2162, 0.0
  %v2573 = vmax.f32 %v2165, 0.0
  %v2574 = vmax.f32 %v2170, 0.0
  %v2575 = vmax.f32 %v2173, 0.0
  %v2576 = vmax.f32 %v2178, 0.0
  %v2577 = vmax.f32 %v2181, 0.0
  %v2578 = vmax.f32 %v2186, 0.0
  %v2579 = vmax.f32 %v2189, 0.0
  %v2580 = vmax.f32 %v2194, 0.0
  %v2581 = vmax.f32 %v2197, 0.0
  %v2582 = vmax.f32 %v2202, 0.0
  %v2583 = vmax.f32 %v2205, 0.0
  %v2584 = vmax.f32 %v2210, 0.0
  %v2585 = vmax.f32 %v2213, 0.0
  %v2586 = vmax.f32 %v2218, 0.0
  %v2587 = vmax.f32 %v2221, 0.0
  %v2588 = vmax.f32 %v2226, 0.0
  %v2589 = vmax.f32 %v2229, 0.0
  %v2590 = vmax.f32 %v2234, 0.0
  %v2591 = vmax.f32 %v2237, 0.0
  %v2592 = vmax.f32 %v2242, 0.0
  %v2593 = vmax.f32 %v2245, 0.0
  %v2594 = vmax.f32 %v2250, 0.0
  %v2595 = vmax.f32 %v2253, 0.0
  %v2596 = vmax.f32 %v2258, 0.0
  %v2597 = vmax.f32 %v2261, 0.0
  %v2598 = vmax.f32 %v2266, 0.0
  %v2599 = vmax.f32 %v2269, 0.0
  %v2600 = vmax.f32 %v2274, 0.0
  %v2601 = vmax.f32 %v2277, 0.0
  %v2602 = vmax.f32 %v2282, 0.0
  %v2603 = vmax.f32 %v2285, 0.0
  %v2604 = vmax.f32 %v2290, 0.0
  %v2605 = vmax.f32 %v2293, 0.0
  %v2606 = vmax.f32 %v2298, 0.0
  %v2607 = vmax.f32 %v2301, 0.0
  %v2608 = vmax.f32 %v2306, 0.0
  %v2609 = vmax.f32 %v2309, 0.0
  %v2610 = vmax.f32 %v2314, 0.0
  %v2611 = vmax.f32 %v2317, 0.0
  %v2612 = vmax.f32 %v2322, 0.0
  %v2613 = vmax.f32 %v2325, 0.0
  %v2614 = vmax.f32 %v2330, 0.0
  %v2615 = vmax.f32 %v2333, 0.0
  %v2616 = vmax.f32 %v2338, 0.0
  %v2617 = vmax.f32 %v2341, 0.0
  %v2618 = vmax.f32 %v2346, 0.0
  %v2619 = vmax.f32 %v2349, 0.0
  %v2620 = vmax.f32 %v2354, 0.0
  %v2621 = vmax.f32 %v2357, 0.0
  %v2622 = vmax.f32 %v2362, 0.0
  %v2623 = vmax.f32 %v2365, 0.0
  %v2624 = vadd.f32 %v2368, %v2369
  %v2625 = vadd.f32 %v2624, %v2370
  %v2626 = vadd.f32 %v2625, %v2371
  %v2627 = vadd.f32 %v2626, %v2372
  %v2628 = vadd.f32 %v2627, %v2373
  %v2629 = vadd.f32 %v2628, %v2374
  %v2630 = vadd.f32 %v2629, %v2375
  %v2631 = vadd.f32 %v2630, %v2376
  %v2632 = vadd.f32 %v2631, %v2377
  %v2633 = vadd.f32 %v2632, %v2378
  %v2634 = vadd.f32 %v2633, %v2379
  %v2635 = vadd.f32 %v2634, %v2380
  %v2636 = vadd.f32 %v2635, %v2381
  %v2637 = vadd.f32 %v2636, %v2382
  %v2638 = vadd.f32 %v2637, %v2383
  %v2639 = vadd.f32 %v2638, %v2384
  %v2640 = vadd.f32 %v2639, %v2385
  %v2641 = vadd.f32 %v2640, %v2386
  %v2642 = vadd.f32 %v2641, %v2387
  %v2643 = vadd.f32 %v2642, %v2388
  %v2644 = vadd.f32 %v2643, %v2389
  %v2645 = vadd.f32 %v2644, %v2390
  %v2646 = vadd.f32 %v2645, %v2391
  %v2647 = vadd.f32 %v2646, %v2392
  %v2648 = vadd.f32 %v2647, %v2393
  %v2649 = vadd.f32 %v2648, %v2394
  %v2650 = vadd.f32 %v2649, %v2395
  %v2651 = vadd.f32 %v2650, %v2396
  %v2652 = vadd.f32 %v2651, %v2397
  %v2653 = vadd.f32 %v2652, %v2398
  %v2654 = vadd.f32 %v2653, %v2399
  %v2655 = vrot.slane %v2654, 4
  %v2656 = vadd.f32 %v2654, %v2655
  %v2657 = vrot.slane %v2656, 2
  %v2658 = vadd.f32 %v2656, %v2657
  %v2659 = vrot.slane %v2658, 1
  %v2660 = vadd.f32 %v2658, %v2659
  %v2661 = vadd.f32 %v2400, %v2401
  %v2662 = vadd.f32 %v2661, %v2402
  %v2663 = vadd.f32 %v2662, %v2403
  %v2664 = vadd.f32 %v2663, %v2404
  %v2665 = vadd.f32 %v2664, %v2405
  %v2666 = vadd.f32 %v2665, %v2406
  %v2667 = vadd.f32 %v2666, %v2407
  %v2668 = vadd.f32 %v2667, %v2408
  %v2669 = vadd.f32 %v2668, %v2409
  %v2670 = vadd.f32 %v2669, %v2410
  %v2671 = vadd.f32 %v2670, %v2411
  %v2672 = vadd.f32 %v2671, %v2412
  %v2673 = vadd.f32 %v2672, %v2413
  %v2674 = vadd.f32 %v2673, %v2414
  %v2675 = vadd.f32 %v2674, %v2415
  %v2676 = vadd.f32 %v2675, %v2416
  %v2677 = vadd.f32 %v2676, %v2417
  %v2678 = vadd.f32 %v2677, %v2418
  %v2679 = vadd.f32 %v2678, %v2419
  %v2680 = vadd.f32 %v2679, %v2420
  %v2681 = vadd.f32 %v2680, %v2421
  %v2682 = vadd.f32 %v2681, %v2422
  %v2683 = vadd.f32 %v2682, %v2423
  %v2684 = vadd.f32 %v2683, %v2424
  %v2685 = vadd.f32 %v2684, %v2425
  %v2686 = vadd.f32 %v2685, %v2426
  %v2687 = vadd.f32 %v2686, %v2427
  %v2688 = vadd.f32 %v2687, %v2428
  %v2689 = vadd.f32 %v2688, %v2429
  %v2690 = vadd.f32 %v2689, %v2430
  %v2691 = vadd.f32 %v2690, %v2431
  %v2692 = vrot.slane %v2691, 4
  %v2693 = vadd.f32 %v2691, %v2692
  %v2694 = vrot.slane %v2693, 2
  %v2695 = vadd.f32 %v2693, %v2694
  %v2696 = vrot.slane %v2695, 1
  %v2697 = vadd.f32 %v2695, %v2696
  %v2698 = vadd.f32 %v2432, %v2433
  %v2699 = vadd.f32 %v2698, %v2434
  %v2700 = vadd.f32 %v2699, %v2435
  %v2701 = vadd.f32 %v2700, %v2436
  %v2702 = vadd.f32 %v2701, %v2437
  %v2703 = vadd.f32 %v2702, %v2438
  %v2704 = vadd.f32 %v2703, %v2439
  %v2705 = vadd.f32 %v2704, %v2440
  %v2706 = vadd.f32 %v2705, %v2441
  %v2707 = vadd.f32 %v2706, %v2442
  %v2708 = vadd.f32 %v2707, %v2443
  %v2709 = vadd.f32 %v2708, %v2444
  %v2710 = vadd.f32 %v2709, %v2445
  %v2711 = vadd.f32 %v2710, %v2446
  %v2712 = vadd.f32 %v2711, %v2447
  %v2713 = vadd.f32 %v2712, %v2448
  %v2714 = vadd.f32 %v2713, %v2449
  %v2715 = vadd.f32 %v2714, %v2450
  %v2716 = vadd.f32 %v2715, %v2451
  %v2717 = vadd.f32 %v2716, %v2452
  %v2718 = vadd.f32 %v2717, %v2453
  %v2719 = vadd.f32 %v2718, %v2454
  %v2720 = vadd.f32 %v2719, %v2455
  %v2721 = vadd.f32 %v2720, %v2456
  %v2722 = vadd.f32 %v2721, %v2457
  %v2723 = vadd.f32 %v2722, %v2458
  %v2724 = vadd.f32 %v2723, %v2459
  %v2725 = vadd.f32 %v2724, %v2460
  %v2726 = vadd.f32 %v2725, %v2461
  %v2727 = vadd.f32 %v2726, %v2462
  %v2728 = vadd.f32 %v2727, %v2463
  %v2729 = vrot.slane %v2728, 4
  %v2730 = vadd.f32 %v2728, %v2729
  %v2731 = vrot.slane %v2730, 2
  %v2732 = vadd.f32 %v2730, %v2731
  %v2733 = vrot.slane %v2732, 1
  %v2734 = vadd.f32 %v2732, %v2733
  %v2735 = vadd.f32 %v2464, %v2465
  %v2736 = vadd.f32 %v2735, %v2466
  %v2737 = vadd.f32 %v2736, %v2467
  %v2738 = vadd.f32 %v2737, %v2468
  %v2739 = vadd.f32 %v2738, %v2469
  %v2740 = vadd.f32 %v2739, %v2470
  %v2741 = vadd.f32 %v2740, %v2471
  %v2742 = vadd.f32 %v2741, %v2472
  %v2743 = vadd.f32 %v2742, %v2473
  %v2744 = vadd.f32 %v2743, %v2474
  %v2745 = vadd.f32 %v2744, %v2475
  %v2746 = vadd.f32 %v2745, %v2476
  %v2747 = vadd.f32 %v2746, %v2477
  %v2748 = vadd.f32 %v2747, %v2478
  %v2749 = vadd.f32 %v2748, %v2479
  %v2750 = vadd.f32 %v2749, %v2480
  %v2751 = vadd.f32 %v2750, %v2481
  %v2752 = vadd.f32 %v2751, %v2482
  %v2753 = vadd.f32 %v2752, %v2483
  %v2754 = vadd.f32 %v2753, %v2484
  %v2755 = vadd.f32 %v2754, %v2485
  %v2756 = vadd.f32 %v2755, %v2486
  %v2757 = vadd.f32 %v2756, %v2487
  %v2758 = vadd.f32 %v2757, %v2488
  %v2759 = vadd.f32 %v2758, %v2489
  %v2760 = vadd.f32 %v2759, %v2490
  %v2761 = vadd.f32 %v2760, %v2491
  %v2762 = vadd.f32 %v2761, %v2492
  %v2763 = vadd.f32 %v2762, %v2493
  %v2764 = vadd.f32 %v2763, %v2494
  %v2765 = vadd.f32 %v2764, %v2495
  %v2766 = vrot.slane %v2765, 4
  %v2767 = vadd.f32 %v2765, %v2766
  %v2768 = vrot.slane %v2767, 2
  %v2769 = vadd.f32 %v2767, %v2768
  %v2770 = vrot.slane %v2769, 1
  %v2771 = vadd.f32 %v2769, %v2770
  %v2772 = vadd.f32 %v2496, %v2497
  %v2773 = vadd.f32 %v2772, %v2498
  %v2774 = vadd.f32 %v2773, %v2499
  %v2775 = vadd.f32 %v2774, %v2500
  %v2776 = vadd.f32 %v2775, %v2501
  %v2777 = vadd.f32 %v2776, %v2502
  %v2778 = vadd.f32 %v2777, %v2503
  %v2779 = vadd.f32 %v2778, %v2504
  %v2780 = vadd.f32 %v2779, %v2505
  %v2781 = vadd.f32 %v2780, %v2506
  %v2782 = vadd.f32 %v2781, %v2507
  %v2783 = vadd.f32 %v2782, %v2508
  %v2784 = vadd.f32 %v2783, %v2509
  %v2785 = vadd.f32 %v2784, %v2510
  %v2786 = vadd.f32 %v2785, %v2511
  %v2787 = vadd.f32 %v2786, %v2512
  %v2788 = vadd.f32 %v2787, %v2513
  %v2789 = vadd.f32 %v2788, %v2514
  %v2790 = vadd.f32 %v2789, %v2515
  %v2791 = vadd.f32 %v2790, %v2516
  %v2792 = vadd.f32 %v2791, %v2517
  %v2793 = vadd.f32 %v2792, %v2518
  %v2794 = vadd.f32 %v2793, %v2519
  %v2795 = vadd.f32 %v2794, %v2520
  %v2796 = vadd.f32 %v2795, %v2521
  %v2797 = vadd.f32 %v2796, %v2522
  %v2798 = vadd.f32 %v2797, %v2523
  %v2799 = vadd.f32 %v2798, %v2524
  %v2800 = vadd.f32 %v2799, %v2525
  %v2801 = vadd.f32 %v2800, %v2526
  %v2802 = vadd.f32 %v2801, %v2527
  %v2803 = vrot.slane %v2802, 4
  %v2804 = vadd.f32 %v2802, %v2803
  %v2805 = vrot.slane %v2804, 2
  %v2806 = vadd.f32 %v2804, %v2805
  %v2807 = vrot.slane %v2806, 1
  %v2808 = vadd.f32 %v2806, %v2807
  %v2809 = vadd.f32 %v2528, %v2529
  %v2810 = vadd.f32 %v2809, %v2530
  %v2811 = vadd.f32 %v2810, %v2531
  %v2812 = vadd.f32 %v2811, %v2532
  %v2813 = vadd.f32 %v2812, %v2533
  %v2814 = vadd.f32 %v2813, %v2534
  %v2815 = vadd.f32 %v2814, %v2535
  %v2816 = vadd.f32 %v2815, %v2536
  %v2817 = vadd.f32 %v2816, %v2537
  %v2818 = vadd.f32 %v2817, %v2538
  %v2819 = vadd.f32 %v2818, %v2539
  %v2820 = vadd.f32 %v2819, %v2540
  %v2821 = vadd.f32 %v2820, %v2541
  %v2822 = vadd.f32 %v2821, %v2542
  %v2823 = vadd.f32 %v2822, %v2543
  %v2824 = vadd.f32 %v2823, %v2544
  %v2825 = vadd.f32 %v2824, %v2545
  %v2826 = vadd.f32 %v2825, %v2546
  %v2827 = vadd.f32 %v2826, %v2547
  %v2828 = vadd.f32 %v2827, %v2548
  %v2829 = vadd.f32 %v2828, %v2549
  %v2830 = vadd.f32 %v2829, %v2550
  %v2831 = vadd.f32 %v2830, %v2551
  %v2832 = vadd.f32 %v2831, %v2552
  %v2833 = vadd.f32 %v2832, %v2553
  %v2834 = vadd.f32 %v2833, %v2554
  %v2835 = vadd.f32 %v2834, %v2555
  %v2836 = vadd.f32 %v2835, %v2556
  %v2837 = vadd.f32 %v2836, %v2557
  %v2838 = vadd.f32 %v2837, %v2558
  %v2839 = vadd.f32 %v2838, %v2559
  %v2840 = vrot.slane %v2839, 4
  %v2841 = vadd.f32 %v2839, %v2840
  %v2842 = vrot.slane %v2841, 2
  %v2843 = vadd.f32 %v2841, %v2842
  %v2844 = vrot.slane %v2843, 1
  %v2845 = vadd.f32 %v2843, %v2844
  %v2846 = vadd.f32 %v2560, %v2561
  %v2847 = vadd.f32 %v2846, %v2562
  %v2848 = vadd.f32 %v2847, %v2563
  %v2849 = vadd.f32 %v2848, %v2564
  %v2850 = vadd.f32 %v2849, %v2565
  %v2851 = vadd.f32 %v2850, %v2566
  %v2852 = vadd.f32 %v2851, %v2567
  %v2853 = vadd.f32 %v2852, %v2568
  %v2854 = vadd.f32 %v2853, %v2569
  %v2855 = vadd.f32 %v2854, %v2570
  %v2856 = vadd.f32 %v2855, %v2571
  %v2857 = vadd.f32 %v2856, %v2572
  %v2858 = vadd.f32 %v2857, %v2573
  %v2859 = vadd.f32 %v2858, %v2574
  %v2860 = vadd.f32 %v2859, %v2575
  %v2861 = vadd.f32 %v2860, %v2576
  %v2862 = vadd.f32 %v2861, %v2577
  %v2863 = vadd.f32 %v2862, %v2578
  %v2864 = vadd.f32 %v2863, %v2579
  %v2865 = vadd.f32 %v2864, %v2580
  %v2866 = vadd.f32 %v2865, %v2581
  %v2867 = vadd.f32 %v2866, %v2582
  %v2868 = vadd.f32 %v2867, %v2583
  %v2869 = vadd.f32 %v2868, %v2584
  %v2870 = vadd.f32 %v2869, %v2585
  %v2871 = vadd.f32 %v2870, %v2586
  %v2872 = vadd.f32 %v2871, %v2587
  %v2873 = vadd.f32 %v2872, %v2588
  %v2874 = vadd.f32 %v2873, %v2589
  %v2875 = vadd.f32 %v2874, %v2590
  %v2876 = vadd.f32 %v2875, %v2591
  %v2877 = vrot.slane %v2876, 4
  %v2878 = vadd.f32 %v2876, %v2877
  %v2879 = vrot.slane %v2878, 2
  %v2880 = vadd.f32 %v2878, %v2879
  %v2881 = vrot.slane %v2880, 1
  %v2882 = vadd.f32 %v2880, %v2881
  %v2883 = vadd.f32 %v2592, %v2593
  %v2884 = vadd.f32 %v2883, %v2594
  %v2885 = vadd.f32 %v2884, %v2595
  %v2886 = vadd.f32 %v2885, %v2596
  %v2887 = vadd.f32 %v2886, %v2597
  %v2888 = vadd.f32 %v2887, %v2598
  %v2889 = vadd.f32 %v2888, %v2599
  %v2890 = vadd.f32 %v2889, %v2600
  %v2891 = vadd.f32 %v2890, %v2601
  %v2892 = vadd.f32 %v2891, %v2602
  %v2893 = vadd.f32 %v2892, %v2603
  %v2894 = vadd.f32 %v2893, %v2604
  %v2895 = vadd.f32 %v2894, %v2605
  %v2896 = vadd.f32 %v2895, %v2606
  %v2897 = vadd.f32 %v2896, %v2607
  %v2898 = vadd.f32 %v2897, %v2608
  %v2899 = vadd.f32 %v2898, %v2609
  %v2900 = vadd.f32 %v2899, %v2610
  %v2901 = vadd.f32 %v2900, %v2611
  %v2902 = vadd.f32 %v2901, %v2612
  %v2903 = vadd.f32 %v2902, %v2613
  %v2904 = vadd.f32 %v2903, %v2614
  %v2905 = vadd.f32 %v2904, %v2615
  %v2906 = vadd.f32 %v2905, %v2616
  %v2907 = vadd.f32 %v2906, %v2617
  %v2908 = vadd.f32 %v2907, %v2618
  %v2909 = vadd.f32 %v2908, %v2619
  %v2910 = vadd.f32 %v2909, %v2620
  %v2911 = vadd.f32 %v2910, %v2621
  %v2912 = vadd.f32 %v2911, %v2622
  %v2913 = vadd.f32 %v2912, %v2623
  %v2914 = vrot.slane %v2913, 4
  %v2915 = vadd.f32 %v2913, %v2914
  %v2916 = vrot.slane %v2915, 2
  %v2917 = vadd.f32 %v2915, %v2916
  %v2918 = vrot.slane %v2917, 1
  %v2919 = vadd.f32 %v2917, %v2918
  %v2920 = vrcp.pop 256.0
  %v2921 = vmul.f32 %v2660, %v2920
  %v2922 = vmul.f32 %v2697, %v2920
  %v2923 = vmul.f32 %v2734, %v2920
  %v2924 = vmul.f32 %v2771, %v2920
  %v2925 = vmul.f32 %v2808, %v2920
  %v2926 = vmul.f32 %v2845, %v2920
  %v2927 = vmul.f32 %v2882, %v2920
  %v2928 = vmul.f32 %v2919, %v2920
  %v2929 = vpack.c.bf16 %v2921, %v2921
  %v2930 = vpack.c.bf16 %v2922, %v2922
  %v2931 = vpack.c.bf16 %v2923, %v2923
  %v2932 = vpack.c.bf16 %v2924, %v2924
  %v2933 = vpack.c.bf16 %v2925, %v2925
  %v2934 = vpack.c.bf16 %v2926, %v2926
  %v2935 = vpack.c.bf16 %v2927, %v2927
  %v2936 = vpack.c.bf16 %v2928, %v2928
  %vm2937 = vcmask 1040384
  %vm2938 = vsmask.f32 256
  %vm2939 = vmand %vm2937, %vm2938
  %v2940 = vld [vmem:[%s3] sm:$0x1]
  %v2941 = vsel %vm2939, %v2929, %v2940
  %2942 = vst [vmem:[%s3] sm:$0x1] %v2941
  %v2943 = vld [vmem:[%s3 + $0x1] sm:$0x1]
  %v2944 = vsel %vm2939, %v2930, %v2943
  %2945 = vst [vmem:[%s3 + $0x1] sm:$0x1] %v2944
  %v2946 = vld [vmem:[%s3 + $0x2] sm:$0x1]
  %v2947 = vsel %vm2939, %v2931, %v2946
  %2948 = vst [vmem:[%s3 + $0x2] sm:$0x1] %v2947
  %v2949 = vld [vmem:[%s3 + $0x3] sm:$0x1]
  %v2950 = vsel %vm2939, %v2932, %v2949
  %2951 = vst [vmem:[%s3 + $0x3] sm:$0x1] %v2950
  %v2952 = vld [vmem:[%s3 + $0x4] sm:$0x1]
  %v2953 = vsel %vm2939, %v2933, %v2952
  %2954 = vst [vmem:[%s3 + $0x4] sm:$0x1] %v2953
  %v2955 = vld [vmem:[%s3 + $0x5] sm:$0x1]
  %v2956 = vsel %vm2939, %v2934, %v2955
  %2957 = vst [vmem:[%s3 + $0x5] sm:$0x1] %v2956
  %v2958 = vld [vmem:[%s3 + $0x6] sm:$0x1]
  %v2959 = vsel %vm2939, %v2935, %v2958
  %2960 = vst [vmem:[%s3 + $0x6] sm:$0x1] %v2959
  %v2961 = vld [vmem:[%s3 + $0x7] sm:$0x1]
  %v2962 = vsel %vm2939, %v2936, %v2961
  %2963 = vst [vmem:[%s3 + $0x7] sm:$0x1] %v2962
  // Predicated region
  $region14: #{tpu_custom_call.1} parent=0 // pred_check
    _
  $region15: #{tpu_custom_call.1} parent=0 // pred_check_branch
    %2965 = sbr.rel (0) target = $region17
  $region16: #{tpu_custom_call.1} parent=0 // pred_region
    _
  $region17: #{tpu_custom_call.1} parent=0 // pred_fallthru
    _
  // Predicated region
  $region18: #{tpu_custom_call.1} parent=0 // pred_check
    _
  $region19: #{tpu_custom_call.1} parent=0 // pred_check_branch
    %2967 = sbr.rel (0) target = $region21
  $region20: #{tpu_custom_call.1} parent=0 // pred_region
    _
  $region21: #{tpu_custom_call.1} parent=0 // pred_fallthru
    _

</llo_original>
